<compile_context>
chip_gen: v7x
topology: tpu7x:2x2x1
jax: 0.10.0
libtpu: 0.0.40
codegen_flags: <defaults>
</compile_context>

<pallas_src>
import jax
import jax.numpy as jnp
from jax import lax
from jax.experimental import pallas as pl
from jax.experimental.pallas import tpu as pltpu


def _upsample_kernel(x_ref, m_ref, b_ref, a_ref, o_ref):
    """Fused SeperableConv2d + PixelShuffle + PReLU for one batch image.

    x_ref: (1, C, H, W)          VMEM raw NCHW input (no host padding)
    m_ref: (3, C*W, C*r*W*r)     VMEM fused (depthwise x pointwise x shuffle) weights
    b_ref: (1, C*r*W*r)          VMEM folded depthwise+pointwise bias, per output lane
    a_ref: (1, C*r*W*r)          VMEM PReLU slope, per output lane
    o_ref: (1, C, H, r*W*r)      VMEM output rows; lane = i*W*r + w*r + j (final layout)
    """
    C = x_ref.shape[1]
    H = x_ref.shape[2]
    W = x_ref.shape[3]
    rWr = o_ref.shape[3]

    # Channel-lane-packed slab with a one-row zero halo (top/bottom) built in registers.
    # Horizontal zero padding needs no columns at all: those taps are absent from m_ref.
    zrow = jnp.zeros((1, W), jnp.float32)
    slabs = []
    for cin in range(C):
        xc = x_ref[0, cin].astype(jnp.float32)                       # (H, W)
        slabs.append(jnp.concatenate([zrow, xc, zrow], axis=0))      # (H+2, W)
    packed = jnp.concatenate(slabs, axis=-1)                         # (H+2, C*W)

    # Depthwise 3x3 + pointwise 1x1 + pixel-shuffle scatter as 3 MXU matmuls total
    # (one per vertical tap); the only data movement per tap is a sublane-shifted slice.
    acc = None
    for ky in range(3):
        p = packed[ky:ky + H, :]                                     # (H, C*W)
        t = jnp.dot(p, m_ref[ky], preferred_element_type=jnp.float32,
                    precision=lax.Precision.HIGHEST)                 # (H, C*r*W*r)
        acc = t if acc is None else acc + t

    acc = acc + b_ref[...]                         # folded bias, broadcast over rows
    y = jnp.where(acc >= 0.0, acc, acc * a_ref[...])                 # PReLU per lane

    # Per-channel lane-sliced stores; lane layout already matches NCHW pixel shuffle,
    # so the wrapper reshape is free.  (Masked 64-lane stores at the demo W=16; lane-
    # dense for W >= 32.)
    for c in range(C):
        o_ref[0, c] = y[:, c * rWr:(c + 1) * rWr].astype(o_ref.dtype)


def _pick_vmem_limit():
    # Review: raise the scoped-VMEM cap per generation instead of a fixed value.
    # (Working set here is < 1 MiB, so this only binds for much larger images.)
    limit = 32 * 1024 * 1024
    try:
        cap = pltpu.get_tpu_info().vmem_capacity_bytes
        limit = max(limit, min(cap // 2, 100 * 1024 * 1024))
    except Exception:
        pass
    return limit


def _build_fused_weights(wd_t, bd, wp_t, bp, alpha, C, W, r):
    """Fold depthwise 3x3 + pointwise 1x1 + bias + pixel-shuffle into 3 dense matrices.

    m[ky, cin*W + (w+kx-1), c*rWr + i*W*r + w*r + j] = wd[cin,ky,kx] * wp[c*r^2+i*r+j, cin]
    (entries whose horizontal source column falls in the zero padding are omitted).
    """
    Co = C * r * r
    rWr = r * W * r
    wd_k = wd_t[:, 0, :, :].reshape(C, 9)                    # (C, 9), tap = ky*3 + kx
    wp_mat = wp_t[:, :, 0, 0]                                # (Co, C)
    # Fold the depthwise bias through the (linear) pointwise conv — exact, f32 VPU math.
    bpp = bp + jnp.sum(wp_mat * bd[None, :], axis=1)         # (Co,)

    cin_i, kx_i, w_i, c_i, i_i, j_i = jnp.meshgrid(
        jnp.arange(C), jnp.arange(3), jnp.arange(W),
        jnp.arange(C), jnp.arange(r), jnp.arange(r), indexing="ij")
    u = w_i + kx_i - 1                                        # source column, unpadded
    valid = ((u >= 0) & (u < W)).astype(jnp.float32).reshape(-1)
    rows = (cin_i * W + jnp.clip(u, 0, W - 1)).reshape(-1)
    cols = (c_i * rWr + i_i * (W * r) + w_i * r + j_i).reshape(-1)
    cout = (c_i * (r * r) + i_i * r + j_i).reshape(-1)
    cin_f = cin_i.reshape(-1)
    kx_f = kx_i.reshape(-1)

    mats = []
    for ky in range(3):
        vals = wd_k[cin_f, ky * 3 + kx_f] * wp_mat[cout, cin_f] * valid
        mats.append(jnp.zeros((C * W, C * rWr), jnp.float32).at[rows, cols].add(vals))
    m_fused = jnp.stack(mats, axis=0)                         # (3, C*W, C*r*W*r)

    # Per-output-lane bias / PReLU slope in the (c, i, w, j) lane order.
    bias_lanes = jnp.broadcast_to(bpp.reshape(C, r, 1, r), (C, r, W, r)).reshape(1, C * rWr)
    alpha_lanes = jnp.broadcast_to(alpha.reshape(C, 1, 1, 1), (C, r, W, r)).reshape(1, C * rWr)
    return m_fused, bias_lanes, alpha_lanes


def upsample_block_pallas(x_nchw, wd_t, bd, wp_t, bp, alpha, scale):
    """x_nchw: (N, C, H, W) float32. Returns (N, C, H*scale, W*scale) float32."""
    N, C, H, W = x_nchw.shape
    r = scale
    rWr = r * W * r

    m_fused, bias_lanes, alpha_lanes = _build_fused_weights(wd_t, bd, wp_t, bp, alpha, C, W, r)

    # Whole image per grid step (review: TH = H for small images).  grid=(N,) still has
    # >= 2 parallel steps at the demo batch size, so v7x's two TensorCores both get work.
    # TODO(synk): for large C*W the fused matrix grows as O(C^2 * W^2 * r^2); switch to an
    #             im2col (H*W, 9C) @ (9C, C*r^2) MXU matmul plus a batched 0/1 scatter,
    #             and row-tile H with a manual halo DMA once the image outgrows VMEM.
    grid = (N,)

    y = pl.pallas_call(
        _upsample_kernel,
        out_shape=jax.ShapeDtypeStruct((N, C, H, rWr), jnp.float32),
        grid_spec=pltpu.PrefetchScalarGridSpec(
            num_scalar_prefetch=0,
            grid=grid,
            in_specs=[
                pl.BlockSpec((1, C, H, W), lambda n: (n, 0, 0, 0)),      # raw input, no pad
                pl.BlockSpec((3, C * W, C * rWr), lambda n: (0, 0, 0)),  # fused weights (resident)
                pl.BlockSpec((1, C * rWr), lambda n: (0, 0)),            # folded bias per lane
                pl.BlockSpec((1, C * rWr), lambda n: (0, 0)),            # PReLU slope per lane
            ],
            out_specs=pl.BlockSpec((1, C, H, rWr), lambda n: (n, 0, 0, 0)),
        ),
        compiler_params=pltpu.CompilerParams(
            dimension_semantics=("parallel",),
            vmem_limit_bytes=_pick_vmem_limit(),
        ),
    )(x_nchw, m_fused, bias_lanes, alpha_lanes)

    # (N, C, H, r*W*r) and (N, C, H*r, W*r) share the same row-major buffer: free reshape.
    return y.reshape(N, C, H * r, W * r)


def upsample_block_ref(x_nchw, wd_t, bd, wp_t, bp, alpha, scale):
    """Pure-JAX reference (lax.conv) with identical semantics to the PyTorch module."""
    N, C, H, W = x_nchw.shape
    r = scale
    dn = ("NCHW", "OIHW", "NCHW")
    hp = lax.Precision.HIGHEST
    dw = lax.conv_general_dilated(x_nchw, wd_t, (1, 1), ((1, 1), (1, 1)),
                                  dimension_numbers=dn, feature_group_count=C,
                                  precision=hp)
    dw = dw + bd[None, :, None, None]
    pw = lax.conv_general_dilated(dw, wp_t, (1, 1), ((0, 0), (0, 0)),
                                  dimension_numbers=dn, precision=hp)
    pw = pw + bp[None, :, None, None]
    Co = pw.shape[1]
    Cc = Co // (r * r)
    ps = pw.reshape(N, Cc, r, r, H, W).transpose(0, 1, 4, 2, 5, 3).reshape(N, Cc, H * r, W * r)
    a = alpha[None, :, None, None]
    return jnp.where(ps >= 0, ps, ps * a)


if __name__ == "__main__":
    key = jax.random.PRNGKey(0)
    N, C, H, W = 2, 4, 16, 16
    scale = 2
    C_out = C * scale * scale

    k = jax.random.split(key, 6)
    x = jax.random.normal(k[0], (N, C, H, W), dtype=jnp.float32)
    # Depthwise conv weights (PyTorch layout: (C, 1, 3, 3)) and bias (C,)
    wd_t = 0.2 * jax.random.normal(k[1], (C, 1, 3, 3), dtype=jnp.float32)
    bd = 0.1 * jax.random.normal(k[2], (C,), dtype=jnp.float32)
    # Pointwise conv weights (PyTorch layout: (C_out, C, 1, 1)) and bias (C_out,)
    wp_t = 0.2 * jax.random.normal(k[3], (C_out, C, 1, 1), dtype=jnp.float32)
    bp = 0.1 * jax.random.normal(k[4], (C_out,), dtype=jnp.float32)
    # PReLU per-channel slope (num_parameters = in_channels)
    alpha = 0.25 + 0.05 * jax.random.normal(k[5], (C,), dtype=jnp.float32)

    out = upsample_block_pallas(x, wd_t, bd, wp_t, bp, alpha, scale)
    out = jax.block_until_ready(out)

    ref = upsample_block_ref(x, wd_t, bd, wp_t, bp, alpha, scale)
    assert out.shape == (N, C, H * scale, W * scale), out.shape
    err = float(jnp.max(jnp.abs(out - ref)))
    assert jnp.allclose(out, ref, atol=1e-4, rtol=1e-4), err

    print("KERNEL_OK")
</pallas_src>

<mosaic_0001>
module attributes {stable_mosaic.version = 11 : i64} {
  func.func @_upsample_kernel(%arg0: i32, %arg1: memref<1x4x16x16xf32, #tpu.memory_space<vmem>>, %arg2: memref<3x64x256xf32, #tpu.memory_space<vmem>>, %arg3: memref<1x256xf32, #tpu.memory_space<vmem>>, %arg4: memref<1x256xf32, #tpu.memory_space<vmem>>, %arg5: memref<1x4x16x64xf32, #tpu.memory_space<vmem>>) attributes {dimension_semantics = [#tpu.dimension_semantics<parallel>], iteration_bounds = array<i64: 2>, scalar_prefetch = 0 : i64, scratch_operands = 0 : i64, tpu.core_type = #tpu.core_type<tc>, window_params = [{transform_indices = @transform_0, window_bounds = array<i64: 1, 4, 16, 16>}, {pipeline_mode = #tpu.pipeline_mode<synchronous>, transform_indices = @transform_1, window_bounds = array<i64: 3, 64, 256>}, {pipeline_mode = #tpu.pipeline_mode<synchronous>, transform_indices = @transform_2, window_bounds = array<i64: 1, 256>}, {pipeline_mode = #tpu.pipeline_mode<synchronous>, transform_indices = @transform_3, window_bounds = array<i64: 1, 256>}, {transform_indices = @transform_4, window_bounds = array<i64: 1, 4, 16, 64>}]} {
    %cst = arith.constant 0.000000e+00 : f32
    %0 = vector.broadcast %cst : f32 to vector<1x16xf32>
    %c0 = arith.constant 0 : index
    %c0_0 = arith.constant 0 : index
    %c0_1 = arith.constant 0 : index
    %c0_2 = arith.constant 0 : index
    %1 = vector.load %arg1[%c0, %c0_0, %c0_1, %c0_2] : memref<1x4x16x16xf32, #tpu.memory_space<vmem>>, vector<1x1x16x16xf32>
    %2 = vector.shape_cast %1 : vector<1x1x16x16xf32> to vector<16x16xf32>
    %3 = tpu.concatenate %0, %2, %0 in 0 : vector<1x16xf32>, vector<16x16xf32>, vector<1x16xf32> -> vector<18x16xf32>
    %c0_3 = arith.constant 0 : index
    %c1 = arith.constant 1 : index
    %c0_4 = arith.constant 0 : index
    %c0_5 = arith.constant 0 : index
    %4 = vector.load %arg1[%c0_3, %c1, %c0_4, %c0_5] : memref<1x4x16x16xf32, #tpu.memory_space<vmem>>, vector<1x1x16x16xf32>
    %5 = vector.shape_cast %4 : vector<1x1x16x16xf32> to vector<16x16xf32>
    %6 = tpu.concatenate %0, %5, %0 in 0 : vector<1x16xf32>, vector<16x16xf32>, vector<1x16xf32> -> vector<18x16xf32>
    %c0_6 = arith.constant 0 : index
    %c2 = arith.constant 2 : index
    %c0_7 = arith.constant 0 : index
    %c0_8 = arith.constant 0 : index
    %7 = vector.load %arg1[%c0_6, %c2, %c0_7, %c0_8] : memref<1x4x16x16xf32, #tpu.memory_space<vmem>>, vector<1x1x16x16xf32>
    %8 = vector.shape_cast %7 : vector<1x1x16x16xf32> to vector<16x16xf32>
    %9 = tpu.concatenate %0, %8, %0 in 0 : vector<1x16xf32>, vector<16x16xf32>, vector<1x16xf32> -> vector<18x16xf32>
    %c0_9 = arith.constant 0 : index
    %c3 = arith.constant 3 : index
    %c0_10 = arith.constant 0 : index
    %c0_11 = arith.constant 0 : index
    %10 = vector.load %arg1[%c0_9, %c3, %c0_10, %c0_11] : memref<1x4x16x16xf32, #tpu.memory_space<vmem>>, vector<1x1x16x16xf32>
    %11 = vector.shape_cast %10 : vector<1x1x16x16xf32> to vector<16x16xf32>
    %12 = tpu.concatenate %0, %11, %0 in 0 : vector<1x16xf32>, vector<16x16xf32>, vector<1x16xf32> -> vector<18x16xf32>
    %13 = tpu.concatenate %3, %6, %9, %12 in 1 : vector<18x16xf32>, vector<18x16xf32>, vector<18x16xf32>, vector<18x16xf32> -> vector<18x64xf32>
    %14 = vector.extract_strided_slice %13 {offsets = [0, 0], sizes = [16, 64], strides = [1, 1]} : vector<18x64xf32> to vector<16x64xf32>
    %c0_12 = arith.constant 0 : index
    %c0_13 = arith.constant 0 : index
    %c0_14 = arith.constant 0 : index
    %15 = vector.load %arg2[%c0_12, %c0_13, %c0_14] : memref<3x64x256xf32, #tpu.memory_space<vmem>>, vector<1x64x256xf32>
    %16 = vector.shape_cast %15 : vector<1x64x256xf32> to vector<64x256xf32>
    %cst_15 = arith.constant dense<0.000000e+00> : vector<16x256xf32>
    %17 = tpu.matmul %14, %16, %cst_15 {dimension_numbers = #tpu.dot_dimension_numbers<[1], [0], [0], [1], [0, 0, 1, 1], [], []>, precision = #tpu.contract_precision<fp32>} : vector<16x64xf32>, vector<64x256xf32>, vector<16x256xf32> -> vector<16x256xf32>
    %18 = vector.extract_strided_slice %13 {offsets = [1, 0], sizes = [16, 64], strides = [1, 1]} : vector<18x64xf32> to vector<16x64xf32>
    %c1_16 = arith.constant 1 : index
    %c0_17 = arith.constant 0 : index
    %c0_18 = arith.constant 0 : index
    %19 = vector.load %arg2[%c1_16, %c0_17, %c0_18] : memref<3x64x256xf32, #tpu.memory_space<vmem>>, vector<1x64x256xf32>
    %20 = vector.shape_cast %19 : vector<1x64x256xf32> to vector<64x256xf32>
    %cst_19 = arith.constant dense<0.000000e+00> : vector<16x256xf32>
    %21 = tpu.matmul %18, %20, %cst_19 {dimension_numbers = #tpu.dot_dimension_numbers<[1], [0], [0], [1], [0, 0, 1, 1], [], []>, precision = #tpu.contract_precision<fp32>} : vector<16x64xf32>, vector<64x256xf32>, vector<16x256xf32> -> vector<16x256xf32>
    %22 = arith.addf %17, %21 : vector<16x256xf32>
    %23 = vector.extract_strided_slice %13 {offsets = [2, 0], sizes = [16, 64], strides = [1, 1]} : vector<18x64xf32> to vector<16x64xf32>
    %c2_20 = arith.constant 2 : index
    %c0_21 = arith.constant 0 : index
    %c0_22 = arith.constant 0 : index
    %24 = vector.load %arg2[%c2_20, %c0_21, %c0_22] : memref<3x64x256xf32, #tpu.memory_space<vmem>>, vector<1x64x256xf32>
    %25 = vector.shape_cast %24 : vector<1x64x256xf32> to vector<64x256xf32>
    %cst_23 = arith.constant dense<0.000000e+00> : vector<16x256xf32>
    %26 = tpu.matmul %23, %25, %cst_23 {dimension_numbers = #tpu.dot_dimension_numbers<[1], [0], [0], [1], [0, 0, 1, 1], [], []>, precision = #tpu.contract_precision<fp32>} : vector<16x64xf32>, vector<64x256xf32>, vector<16x256xf32> -> vector<16x256xf32>
    %27 = arith.addf %22, %26 : vector<16x256xf32>
    %c0_24 = arith.constant 0 : index
    %c0_25 = arith.constant 0 : index
    %28 = vector.load %arg3[%c0_24, %c0_25] : memref<1x256xf32, #tpu.memory_space<vmem>>, vector<1x256xf32>
    %29 = vector.broadcast %28 : vector<1x256xf32> to vector<16x256xf32>
    %30 = arith.addf %27, %29 : vector<16x256xf32>
    %cst_26 = arith.constant 0.000000e+00 : f32
    %31 = vector.broadcast %cst_26 : f32 to vector<16x256xf32>
    %32 = arith.cmpf oge, %30, %31 : vector<16x256xf32>
    %c0_27 = arith.constant 0 : index
    %c0_28 = arith.constant 0 : index
    %33 = vector.load %arg4[%c0_27, %c0_28] : memref<1x256xf32, #tpu.memory_space<vmem>>, vector<1x256xf32>
    %34 = vector.broadcast %33 : vector<1x256xf32> to vector<16x256xf32>
    %35 = arith.mulf %30, %34 : vector<16x256xf32>
    %36 = arith.select %32, %30, %35 : vector<16x256xi1>, vector<16x256xf32>
    %37 = vector.extract_strided_slice %36 {offsets = [0, 0], sizes = [16, 64], strides = [1, 1]} : vector<16x256xf32> to vector<16x64xf32>
    %c0_29 = arith.constant 0 : index
    %c0_30 = arith.constant 0 : index
    %c0_31 = arith.constant 0 : index
    %c0_32 = arith.constant 0 : index
    %38 = vector.load %arg5[%c0_29, %c0_30, %c0_31, %c0_32] : memref<1x4x16x64xf32, #tpu.memory_space<vmem>>, vector<1x1x16x64xf32>
    %39 = vector.shape_cast %38 : vector<1x1x16x64xf32> to vector<16x64xf32>
    %40 = vector.shape_cast %37 : vector<16x64xf32> to vector<1x1x16x64xf32>
    tpu.vector_store %arg5[%c0_29, %c0_30, %c0_31, %c0_32], %40 {strides = array<i32>} : memref<1x4x16x64xf32, #tpu.memory_space<vmem>>, vector<1x1x16x64xf32>,
    %41 = vector.extract_strided_slice %36 {offsets = [0, 64], sizes = [16, 64], strides = [1, 1]} : vector<16x256xf32> to vector<16x64xf32>
    %c0_33 = arith.constant 0 : index
    %c1_34 = arith.constant 1 : index
    %c0_35 = arith.constant 0 : index
    %c0_36 = arith.constant 0 : index
    %42 = vector.load %arg5[%c0_33, %c1_34, %c0_35, %c0_36] : memref<1x4x16x64xf32, #tpu.memory_space<vmem>>, vector<1x1x16x64xf32>
    %43 = vector.shape_cast %42 : vector<1x1x16x64xf32> to vector<16x64xf32>
    %44 = vector.shape_cast %41 : vector<16x64xf32> to vector<1x1x16x64xf32>
    tpu.vector_store %arg5[%c0_33, %c1_34, %c0_35, %c0_36], %44 {strides = array<i32>} : memref<1x4x16x64xf32, #tpu.memory_space<vmem>>, vector<1x1x16x64xf32>,
    %45 = vector.extract_strided_slice %36 {offsets = [0, 128], sizes = [16, 64], strides = [1, 1]} : vector<16x256xf32> to vector<16x64xf32>
    %c0_37 = arith.constant 0 : index
    %c2_38 = arith.constant 2 : index
    %c0_39 = arith.constant 0 : index
    %c0_40 = arith.constant 0 : index
    %46 = vector.load %arg5[%c0_37, %c2_38, %c0_39, %c0_40] : memref<1x4x16x64xf32, #tpu.memory_space<vmem>>, vector<1x1x16x64xf32>
    %47 = vector.shape_cast %46 : vector<1x1x16x64xf32> to vector<16x64xf32>
    %48 = vector.shape_cast %45 : vector<16x64xf32> to vector<1x1x16x64xf32>
    tpu.vector_store %arg5[%c0_37, %c2_38, %c0_39, %c0_40], %48 {strides = array<i32>} : memref<1x4x16x64xf32, #tpu.memory_space<vmem>>, vector<1x1x16x64xf32>,
    %49 = vector.extract_strided_slice %36 {offsets = [0, 192], sizes = [16, 64], strides = [1, 1]} : vector<16x256xf32> to vector<16x64xf32>
    %c0_41 = arith.constant 0 : index
    %c3_42 = arith.constant 3 : index
    %c0_43 = arith.constant 0 : index
    %c0_44 = arith.constant 0 : index
    %50 = vector.load %arg5[%c0_41, %c3_42, %c0_43, %c0_44] : memref<1x4x16x64xf32, #tpu.memory_space<vmem>>, vector<1x1x16x64xf32>
    %51 = vector.shape_cast %50 : vector<1x1x16x64xf32> to vector<16x64xf32>
    %52 = vector.shape_cast %49 : vector<16x64xf32> to vector<1x1x16x64xf32>
    tpu.vector_store %arg5[%c0_41, %c3_42, %c0_43, %c0_44], %52 {strides = array<i32>} : memref<1x4x16x64xf32, #tpu.memory_space<vmem>>, vector<1x1x16x64xf32>,
    return
  }
  func.func @transform_0(%arg0: i32) -> (i32, i32, i32, i32) {
    %c0_i32 = arith.constant 0 : i32
    %c0_i32_0 = arith.constant 0 : i32
    %c0_i32_1 = arith.constant 0 : i32
    %c0_i32_2 = arith.constant 0 : i32
    return %arg0, %c0_i32, %c0_i32_0, %c0_i32_1 : i32, i32, i32, i32
  }
  func.func @transform_1(%arg0: i32) -> (i32, i32, i32) {
    %c0_i32 = arith.constant 0 : i32
    %c0_i32_0 = arith.constant 0 : i32
    %c0_i32_1 = arith.constant 0 : i32
    %c0_i32_2 = arith.constant 0 : i32
    return %c0_i32, %c0_i32_0, %c0_i32_1 : i32, i32, i32
  }
  func.func @transform_2(%arg0: i32) -> (i32, i32) {
    %c0_i32 = arith.constant 0 : i32
    %c0_i32_0 = arith.constant 0 : i32
    %c0_i32_1 = arith.constant 0 : i32
    return %c0_i32, %c0_i32_0 : i32, i32
  }
  func.func @transform_3(%arg0: i32) -> (i32, i32) {
    %c0_i32 = arith.constant 0 : i32
    %c0_i32_0 = arith.constant 0 : i32
    %c0_i32_1 = arith.constant 0 : i32
    return %c0_i32, %c0_i32_0 : i32, i32
  }
  func.func @transform_4(%arg0: i32) -> (i32, i32, i32, i32) {
    %c0_i32 = arith.constant 0 : i32
    %c0_i32_0 = arith.constant 0 : i32
    %c0_i32_1 = arith.constant 0 : i32
    %c0_i32_2 = arith.constant 0 : i32
    return %arg0, %c0_i32, %c0_i32_0, %c0_i32_1 : i32, i32, i32, i32
  }
}

</mosaic_0001>

<llo_original>
// kernel: tpu_custom_call.1
$region0: #{tpu_custom_call.1}
  #allocation0 [shape = 'u32[]', space=smem, size = 0x4, offset = 0x4, fixed_abs, tag = 'smem constant byte address 0x4 - core index']
  #allocation1 [shape = 'u32[144,128]{1,0:T(1,128)}', space=vmem, size = 0x12000, scoped, tag = 'internal scratch']
  %s0 = inlined_call_operand.hbm [shape: f32[2,4,16,16], index: 0, kind: input, shape index: {}]
  %s1 = inlined_call_operand.hbm [shape: f32[3,64,256], index: 1, kind: input, shape index: {}]
  %s2 = inlined_call_operand.vmem [shape: f32[1,256], index: 2, kind: input, shape index: {}]
  %s3 = inlined_call_operand.vmem [shape: f32[1,256], index: 3, kind: input, shape index: {}]
  %s4 = inlined_call_operand.hbm [shape: f32[2,4,16,64], index: 4, kind: output, shape index: {}]
  %s5 = sld [smem:[#allocation0]]
  $region57: #{tpu_custom_call.1} parent=0
    _
  %s7 = ssub.s32 1, %s5
  %s8 = scalar_select 0, %s7, %s5
  $region1: #{tpu_custom_call.1} parent=0
    #allocation2 [shape = 'u8[65536]{0}', space=vmem, size = 0x10000, scoped, tag = 'input window, operand 0']
    #allocation3 [shape = 's32[2]{0}', space=sflag, size = 0x8, scoped, tag = 'scoped memory for tpu_custom_call.1']
    #allocation4 [shape = 's32[2]{0}', space=sflag, size = 0x8, scoped, tag = 'scoped memory for tpu_custom_call.1']
    #allocation5 [shape = 'u8[196608]{0}', space=vmem, size = 0x30000, scoped, tag = 'input window, operand 1, single buffered']
    #allocation6 [shape = 's32[1]{0}', space=sflag, size = 0x4, scoped, tag = 'scoped memory for tpu_custom_call.1']
    #allocation7 [shape = 'u8[65536]{0}', space=vmem, size = 0x10000, scoped, tag = 'output window, operand 0']
    %9 = vsyncpa [#allocation3], 0
    %s10 = scalar_lea.sflag [#allocation3], 1
    %11 = vsyncpa %s10, 0
    %12 = vsyncpa [#allocation6], 0
    %13 = vsyncpa [#allocation4], 0
    %s14 = scalar_lea.sflag [#allocation4], 1
    %15 = vsyncpa %s14, 0
    loop: start=0, step=1, limit=4
    $region2: #{tpu_custom_call.1} parent=1 // loop_pre_header
      _
    $region3: #{tpu_custom_call.1} parent=1 // loop_header
      %s17 = sphi 0, %s21
      %p18 = scmp.ge.s32.totalorder %s17, 4
      %s27 = sphi 0, %s29
      %s30 = sphi 0, %s27
      %s31 = sphi 0, %s30
      %s47 = sphi 0, %s31
      %s51 = sphi 0, %s51
      %s53 = sphi 0, %s51
      %s54 = sphi 0, %s53
      %s68 = sphi 0, %s54
      %s72 = sphi 0, %s72
      %s74 = sphi 0, %s72
      %s75 = sphi 0, %s74
      %s89 = sphi 0, %s75
      %s93 = sphi 0, %s93
      %s95 = sphi 0, %s93
      %s96 = sphi 0, %s95
      %s110 = sphi 0, %s96
      %s116 = sphi 0, %s118
      %s119 = sphi 0, %s116
      %s120 = sphi 0, %s119
      %s136 = sphi 0, %s120
    $region4: #{tpu_custom_call.1} parent=1 // loop_header_branch
      %20 = sbr.rel (%p18) target = $region8
    $region5: #{tpu_custom_call.1} parent=1 // loop_body
      %s22 = ssub.s32 %s17, 1
      %s23 = ssub.s32 %s17, 2
      %s24 = sadd.s32 %s17, 1
      %s25 = ssub.s32 %s17, %s24
      %p26 = scmp.eq.s32.totalorder %s25, 0
      %s28 = sadd.s32 %s27, 1
      %s29 = scalar_select %p26, %s27, %s28
      %p32 = pneg %p26
      %p33 = scmp.eq.s32.totalorder %s17, 1
      %p34 = por %p32, %p33
      %p35 = scmp.ne.s32.totalorder %s27, %s30
      %p36 = scmp.eq.s32.totalorder %s17, 0
      %p37 = por %p35, %p36
      %p38 = scmp.ne.s32.totalorder %s27, %s30
      %p39 = scmp.eq.s32.totalorder %s22, 1
      %p40 = por %p38, %p39
      %p41 = scmp.ne.s32.totalorder %s30, %s31
      %p42 = scmp.eq.s32.totalorder %s22, 0
      %p43 = por %p41, %p42
      %p44 = scmp.ne.s32.totalorder %s30, %s31
      %p45 = scmp.eq.s32.totalorder %s23, 1
      %p46 = por %p44, %p45
      %p48 = scmp.ne.s32.totalorder %s31, %s47
      %p49 = scmp.eq.s32.totalorder %s23, 0
      %p50 = por %p48, %p49
      %s52 = sadd.s32 %s51, 1
      %p55 = scmp.eq.s32.totalorder %s17, 1
      %p56 = scmp.ne.s32.totalorder %s51, %s53
      %p57 = scmp.eq.s32.totalorder %s17, 0
      %p58 = por %p56, %p57
      %p59 = scmp.ne.s32.totalorder %s51, %s53
      %p60 = scmp.eq.s32.totalorder %s22, 1
      %p61 = por %p59, %p60
      %p62 = scmp.ne.s32.totalorder %s53, %s54
      %p63 = scmp.eq.s32.totalorder %s22, 0
      %p64 = por %p62, %p63
      %p65 = scmp.ne.s32.totalorder %s53, %s54
      %p66 = scmp.eq.s32.totalorder %s23, 1
      %p67 = por %p65, %p66
      %p69 = scmp.ne.s32.totalorder %s54, %s68
      %p70 = scmp.eq.s32.totalorder %s23, 0
      %p71 = por %p69, %p70
      %s73 = sadd.s32 %s72, 1
      %p76 = scmp.eq.s32.totalorder %s17, 1
      %p77 = scmp.ne.s32.totalorder %s72, %s74
      %p78 = scmp.eq.s32.totalorder %s17, 0
      %p79 = por %p77, %p78
      %p80 = scmp.ne.s32.totalorder %s72, %s74
      %p81 = scmp.eq.s32.totalorder %s22, 1
      %p82 = por %p80, %p81
      %p83 = scmp.ne.s32.totalorder %s74, %s75
      %p84 = scmp.eq.s32.totalorder %s22, 0
      %p85 = por %p83, %p84
      %p86 = scmp.ne.s32.totalorder %s74, %s75
      %p87 = scmp.eq.s32.totalorder %s23, 1
      %p88 = por %p86, %p87
      %p90 = scmp.ne.s32.totalorder %s75, %s89
      %p91 = scmp.eq.s32.totalorder %s23, 0
      %p92 = por %p90, %p91
      %s94 = sadd.s32 %s93, 1
      %p97 = scmp.eq.s32.totalorder %s17, 1
      %p98 = scmp.ne.s32.totalorder %s93, %s95
      %p99 = scmp.eq.s32.totalorder %s17, 0
      %p100 = por %p98, %p99
      %p101 = scmp.ne.s32.totalorder %s93, %s95
      %p102 = scmp.eq.s32.totalorder %s22, 1
      %p103 = por %p101, %p102
      %p104 = scmp.ne.s32.totalorder %s95, %s96
      %p105 = scmp.eq.s32.totalorder %s22, 0
      %p106 = por %p104, %p105
      %p107 = scmp.ne.s32.totalorder %s95, %s96
      %p108 = scmp.eq.s32.totalorder %s23, 1
      %p109 = por %p107, %p108
      %p111 = scmp.ne.s32.totalorder %s96, %s110
      %p112 = scmp.eq.s32.totalorder %s23, 0
      %p113 = por %p111, %p112
      %s114 = ssub.s32 %s17, %s24
      %p115 = scmp.eq.s32.totalorder %s114, 0
      %s117 = sadd.s32 %s116, 1
      %s118 = scalar_select %p115, %s116, %s117
      %p121 = pneg %p115
      %p122 = scmp.eq.s32.totalorder %s17, 1
      %p123 = por %p121, %p122
      %p124 = scmp.ne.s32.totalorder %s116, %s119
      %p125 = scmp.eq.s32.totalorder %s17, 0
      %p126 = por %p124, %p125
      %p127 = scmp.ne.s32.totalorder %s116, %s119
      %p128 = scmp.eq.s32.totalorder %s22, 1
      %p129 = por %p127, %p128
      %p130 = scmp.ne.s32.totalorder %s119, %s120
      %p131 = scmp.eq.s32.totalorder %s22, 0
      %p132 = por %p130, %p131
      %p133 = scmp.ne.s32.totalorder %s119, %s120
      %p134 = scmp.eq.s32.totalorder %s23, 1
      %p135 = por %p133, %p134
      %p137 = scmp.ne.s32.totalorder %s120, %s136
      %p138 = scmp.eq.s32.totalorder %s23, 0
      %p139 = por %p137, %p138
      %p140 = scmp.le.s32.totalorder 1, %s17
      %p141 = scmp.lt.s32.totalorder %s17, 3
      %p142 = pnand %p140, %p141
      %p143 = pneg %p142
      // Predicated region
      $region9: #{tpu_custom_call.1} parent=5 // pred_check
        _
      $region10: #{tpu_custom_call.1} parent=5 // pred_check_branch
        %145 = sbr.rel (%p142) target = $region12
      $region11: #{tpu_custom_call.1} parent=5 // pred_region
        %s146 = ssub.s32 %s17, 1
        // Predicated region
        $region13: #{tpu_custom_call.1} parent=11 // pred_check
          %p147 = pneg %p64
        $region14: #{tpu_custom_call.1} parent=11 // pred_check_branch
          %149 = sbr.rel (%p147) target = $region16
        $region15: #{tpu_custom_call.1} parent=11 // pred_region
          %s151 = ssub.s32 6144, 6144
          %152 = vsyncadd [#allocation6], %s151
          %s153 = sshll.u32 [#allocation5], 4
          %s154 = int_to_ptr.vmem [resolvable:$true] %s153
          %159 = dma.hbm_to_vmem [thread:$0]  %s1, 6144, %s154, [#allocation6], 256, 256, 16
        $region16: #{tpu_custom_call.1} parent=11 // pred_fallthru
          _
        // Predicated region
        $region17: #{tpu_custom_call.1} parent=11 // pred_check
          %p160 = pneg %p85
        $region18: #{tpu_custom_call.1} parent=11 // pred_check_branch
          %162 = sbr.rel (%p160) target = $region20
        $region19: #{tpu_custom_call.1} parent=11 // pred_region
          _
        $region20: #{tpu_custom_call.1} parent=11 // pred_fallthru
          _
        // Predicated region
        $region21: #{tpu_custom_call.1} parent=11 // pred_check
          %p163 = pneg %p106
        $region22: #{tpu_custom_call.1} parent=11 // pred_check_branch
          %165 = sbr.rel (%p163) target = $region24
        $region23: #{tpu_custom_call.1} parent=11 // pred_region
          _
        $region24: #{tpu_custom_call.1} parent=11 // pred_fallthru
          _
      $region12: #{tpu_custom_call.1} parent=5 // pred_fallthru
        _
      %p166 = scmp.lt.s32.totalorder %s17, 2
      // Predicated region
      $region25: #{tpu_custom_call.1} parent=5 // pred_check
        %p167 = pneg %p166
      $region26: #{tpu_custom_call.1} parent=5 // pred_check_branch
        %169 = sbr.rel (%p167) target = $region28
      $region27: #{tpu_custom_call.1} parent=5 // pred_region
        // Predicated region
        $region29: #{tpu_custom_call.1} parent=27 // pred_check
          %p170 = pneg %p37
        $region30: #{tpu_custom_call.1} parent=27 // pred_check_branch
          %172 = sbr.rel (%p170) target = $region32
        $region31: #{tpu_custom_call.1} parent=27 // pred_region
          %s173 = sand.u32 %s27, 1
          %s174 = scalar_lea.sflag [#allocation3], %s173
          %s175 = sand.u32 %s27, 1
          %s176 = smul.addr %s175, 64
          %s177 = scalar_lea.vmem [#allocation2], %s176
          %s179 = ssub.s32 1024, 1024
          %180 = vsyncadd %s174, %s179
          %s181 = smul.addr %s17, 8
          %s182 = smul.addr %s181, 128
          %s183 = scalar_lea.hbm %s0, %s182
          %s184 = sshll.u32 %s177, 4
          %s185 = int_to_ptr.vmem [resolvable:$true] %s184
          %190 = dma.hbm_to_vmem [thread:$0]  %s183, 1024, %s185, %s174, 128, 128, 8
        $region32: #{tpu_custom_call.1} parent=27 // pred_fallthru
          _
      $region28: #{tpu_custom_call.1} parent=5 // pred_fallthru
        _
      %p191 = scmp.le.s32.totalorder 1, %s17
      %p192 = scmp.lt.s32.totalorder %s17, 3
      %p193 = pnand %p191, %p192
      %p194 = pneg %p193
      // Predicated region
      $region33: #{tpu_custom_call.1} parent=5 // pred_check
        _
      $region34: #{tpu_custom_call.1} parent=5 // pred_check_branch
        %196 = sbr.rel (%p193) target = $region36
      $region35: #{tpu_custom_call.1} parent=5 // pred_region
        %s197 = ssub.s32 %s17, 1
        %s198 = sand.u32 %s30, 1
        %s199 = scalar_lea.sflag [#allocation3], %s198
        %s200 = sand.u32 %s30, 1
        %s201 = smul.addr %s200, 64
        %s202 = scalar_lea.vmem [#allocation2], %s201
        // Predicated region
        $region37: #{tpu_custom_call.1} parent=35 // pred_check
          %p203 = pneg %p43
        $region38: #{tpu_custom_call.1} parent=35 // pred_check_branch
          %205 = sbr.rel (%p203) target = $region40
        $region39: #{tpu_custom_call.1} parent=35 // pred_region
          %206 = dma.done %s199, 1024
        $region40: #{tpu_custom_call.1} parent=35 // pred_fallthru
          _
        // Predicated region
        $region41: #{tpu_custom_call.1} parent=35 // pred_check
          %p207 = pneg %p64
        $region42: #{tpu_custom_call.1} parent=35 // pred_check_branch
          %209 = sbr.rel (%p207) target = $region44
        $region43: #{tpu_custom_call.1} parent=35 // pred_region
          %210 = dma.done [#allocation6], 6144
        $region44: #{tpu_custom_call.1} parent=35 // pred_fallthru
          _
        %s211 = sand.u32 %s30, 1
        %s212 = scalar_lea.sflag [#allocation3], %s211
        %s213 = sand.u32 %s30, 1
        %s214 = smul.addr %s213, 64
        %s215 = scalar_lea.vmem [#allocation2], %s214
        %p216 = pneg %p43
        %p217 = pneg %p40
        %p218 = pneg %p64
        %p219 = pneg %p61
        %p220 = pneg %p85
        %p221 = pneg %p82
        %p222 = pneg %p106
        %p223 = pneg %p103
        %p224 = pneg %p132
        %p225 = pneg %p129
        %s226 = sand.u32 %s119, 1
        %s227 = scalar_lea.sflag [#allocation4], %s226
        %s228 = sand.u32 %s119, 1
        %s229 = smul.addr %s228, 64
        %s230 = scalar_lea.vmem [#allocation7], %s229
        %v231 = vld [vmem:[%s202] sm:$0xff]
        %v232 = vld [vmem:[%s202 + $0x8] sm:$0xff]
        %vm235 = vcmask 1040384
        %v236 = vrot.slane %v231, 7
        %v237 = vrot.slane %v232, 7
        %v238 = vsel %vm235, %v236, %v237
        %v242 = vsel %vm235, 0.0, %v236
        %v243 = vsel %vm235, %v237, 0.0
        %s244 = scalar_lea.vmem %s202, 16 [#allocation2]
        %v245 = vld [vmem:[%s244] sm:$0xff]
        %v246 = vld [vmem:[%s244 + $0x8] sm:$0xff]
        %v249 = vrot.slane %v245, 7
        %v250 = vrot.slane %v246, 7
        %v251 = vsel %vm235, %v249, %v250
        %v254 = vsel %vm235, 0.0, %v249
        %v255 = vsel %vm235, %v250, 0.0
        %s256 = scalar_lea.vmem %s202, 32 [#allocation2]
        %v257 = vld [vmem:[%s256] sm:$0xff]
        %v258 = vld [vmem:[%s256 + $0x8] sm:$0xff]
        %v261 = vrot.slane %v257, 7
        %v262 = vrot.slane %v258, 7
        %v263 = vsel %vm235, %v261, %v262
        %v266 = vsel %vm235, 0.0, %v261
        %v267 = vsel %vm235, %v262, 0.0
        %s268 = scalar_lea.vmem %s202, 48 [#allocation2]
        %v269 = vld [vmem:[%s268] sm:$0xff]
        %v270 = vld [vmem:[%s268 + $0x8] sm:$0xff]
        %v273 = vrot.slane %v269, 7
        %v274 = vrot.slane %v270, 7
        %v275 = vsel %vm235, %v273, %v274
        %v278 = vsel %vm235, 0.0, %v273
        %v279 = vsel %vm235, %v274, 0.0
        %282 = vrot.lane.b32.xlu0 %v254, 16
        %v283 = vpop.permute.xlu0 %282
        %284 = vrot.lane.b32.xlu0 %v251, 16
        %v285 = vpop.permute.xlu0 %284
        %286 = vrot.lane.b32.xlu0 %v255, 16
        %v287 = vpop.permute.xlu0 %286
        %293 = vrot.lane.b32.xlu0 %v266, 32
        %v294 = vpop.permute.xlu0 %293
        %295 = vrot.lane.b32.xlu0 %v263, 32
        %v296 = vpop.permute.xlu0 %295
        %297 = vrot.lane.b32.xlu0 %v267, 32
        %v298 = vpop.permute.xlu0 %297
        %304 = vrot.lane.b32.xlu0 %v278, 48
        %v305 = vpop.permute.xlu0 %304
        %306 = vrot.lane.b32.xlu0 %v275, 48
        %v307 = vpop.permute.xlu0 %306
        %308 = vrot.lane.b32.xlu0 %v279, 48
        %v309 = vpop.permute.xlu0 %308
        %vm313 = vcmask 130048
        %v314 = vsel %vm313, %v242, %v283
        %v315 = vsel %vm313, %v238, %v285
        %v316 = vsel %vm313, %v243, %v287
        %vm317 = vcmask 261120
        %v318 = vsel %vm317, %v314, %v294
        %v319 = vsel %vm317, %v315, %v296
        %v320 = vsel %vm317, %v316, %v298
        %vm321 = vcmask 392192
        %v322 = vsel %vm321, %v318, %v305
        %v323 = vsel %vm321, %v319, %v307
        %v324 = vsel %vm321, %v320, %v309
        %v325 = vld [vmem:[#allocation5] sm:$0xff]
        %v326 = vld [vmem:[#allocation5 + $0x8] sm:$0xff]
        %v327 = vld [vmem:[#allocation5 + $0x10] sm:$0xff]
        %v328 = vld [vmem:[#allocation5 + $0x18] sm:$0xff]
        %v329 = vld [vmem:[#allocation5 + $0x20] sm:$0xff]
        %v330 = vld [vmem:[#allocation5 + $0x28] sm:$0xff]
        %v331 = vld [vmem:[#allocation5 + $0x30] sm:$0xff]
        %v332 = vld [vmem:[#allocation5 + $0x38] sm:$0xff]
        %v333 = vld [vmem:[#allocation5 + $0x40] sm:$0xff]
        %v334 = vld [vmem:[#allocation5 + $0x48] sm:$0xff]
        %v335 = vld [vmem:[#allocation5 + $0x50] sm:$0xff]
        %v336 = vld [vmem:[#allocation5 + $0x58] sm:$0xff]
        %v337 = vld [vmem:[#allocation5 + $0x60] sm:$0xff]
        %v338 = vld [vmem:[#allocation5 + $0x68] sm:$0xff]
        %v339 = vld [vmem:[#allocation5 + $0x70] sm:$0xff]
        %v340 = vld [vmem:[#allocation5 + $0x78] sm:$0xff]
        %s341 = scalar_lea.vmem [#allocation5], 128
        %v342 = vld [vmem:[%s341] sm:$0xff]
        %v343 = vld [vmem:[%s341 + $0x8] sm:$0xff]
        %v344 = vld [vmem:[%s341 + $0x10] sm:$0xff]
        %v345 = vld [vmem:[%s341 + $0x18] sm:$0xff]
        %v346 = vld [vmem:[%s341 + $0x20] sm:$0xff]
        %v347 = vld [vmem:[%s341 + $0x28] sm:$0xff]
        %v348 = vld [vmem:[%s341 + $0x30] sm:$0xff]
        %v349 = vld [vmem:[%s341 + $0x38] sm:$0xff]
        %v350 = vld [vmem:[%s341 + $0x40] sm:$0xff]
        %v351 = vld [vmem:[%s341 + $0x48] sm:$0xff]
        %v352 = vld [vmem:[%s341 + $0x50] sm:$0xff]
        %v353 = vld [vmem:[%s341 + $0x58] sm:$0xff]
        %v354 = vld [vmem:[%s341 + $0x60] sm:$0xff]
        %v355 = vld [vmem:[%s341 + $0x68] sm:$0xff]
        %v356 = vld [vmem:[%s341 + $0x70] sm:$0xff]
        %v357 = vld [vmem:[%s341 + $0x78] sm:$0xff]
        %vm361 = vcmask 1046528
        %v362 = vrot.slane %v322, 1
        %v363 = vrot.slane %v323, 1
        %v364 = vsel %vm361, %v362, %v363
        %v365 = vrot.slane %v324, 1
        %v366 = vsel %vm361, %v363, %v365
        %vm367 = vcmask 523264
        %v368 = vsel %vm367, %v364, 0
        %v370 = vsel %vm367, %v366, 0
        %v372 = vand.u32 %v343, 4294901760
        %373 = vmatprep.subr.mxu0 %v372
        %v374 = vand.u32 %v342, 4294901760
        %375 = vmatpush1.msra.mxu0 %v374
        %v376 = vand.u32 %v345, 4294901760
        %377 = vmatprep.subr.mxu0 %v376
        %v378 = vand.u32 %v344, 4294901760
        %379 = vmatpush1.msra.mxu0 %v378
        %v380 = vand.u32 %v347, 4294901760
        %381 = vmatprep.subr.mxu0 %v380
        %v382 = vand.u32 %v346, 4294901760
        %383 = vmatpush1.msra.mxu0 %v382
        %v384 = vand.u32 %v349, 4294901760
        %385 = vmatprep.subr.mxu0 %v384
        %v386 = vand.u32 %v348, 4294901760
        %387 = vmatpush1.msra.mxu0 %v386
        %v388 = vand.u32 %v351, 4294901760
        %389 = vmatprep.subr.mxu0 %v388
        %v390 = vand.u32 %v350, 4294901760
        %391 = vmatpush1.msra.mxu0 %v390
        %v392 = vand.u32 %v353, 4294901760
        %393 = vmatprep.subr.mxu0 %v392
        %v394 = vand.u32 %v352, 4294901760
        %395 = vmatpush1.msra.mxu0 %v394
        %v396 = vand.u32 %v355, 4294901760
        %397 = vmatprep.subr.mxu0 %v396
        %v398 = vand.u32 %v354, 4294901760
        %399 = vmatpush1.msra.mxu0 %v398
        %v400 = vand.u32 %v357, 4294901760
        %401 = vmatprep.subr.mxu0 %v400
        %v402 = vand.u32 %v356, 4294901760
        %403 = vmatpush1.msra.mxu0 %v402
        %404 = vmatprep.subr.mxu0 0.0
        %405 = vmatpush1.msra.mxu0 0.0
        %406 = vmatprep.subr.mxu0 0.0
        %407 = vmatpush1.msra.mxu0 0.0
        %408 = vmatprep.subr.mxu0 0.0
        %409 = vmatpush1.msra.mxu0 0.0
        %410 = vmatprep.subr.mxu0 0.0
        %411 = vmatpush1.msra.mxu0 0.0
        %412 = vmatprep.subr.mxu0 0.0
        %413 = vmatpush1.msra.mxu0 0.0
        %414 = vmatprep.subr.mxu0 0.0
        %415 = vmatpush1.msra.mxu0 0.0
        %416 = vmatprep.subr.mxu0 0.0
        %417 = vmatpush1.msra.mxu0 0.0
        %418 = vmatprep.subr.mxu0 0.0
        %419 = vmatpush1.msra.mxu0 0.0
        %420 = vmatprep.subr.mxu0 0.0
        %421 = vmatpush1.msra.mxu0 0.0
        %422 = vmatprep.subr.mxu0 0.0
        %423 = vmatpush1.msra.mxu0 0.0
        %424 = vmatprep.subr.mxu0 0.0
        %425 = vmatpush1.msra.mxu0 0.0
        %426 = vmatprep.subr.mxu0 0.0
        %427 = vmatpush1.msra.mxu0 0.0
        %428 = vmatprep.subr.mxu0 0.0
        %429 = vmatpush1.msra.mxu0 0.0
        %430 = vmatprep.subr.mxu0 0.0
        %431 = vmatpush1.msra.mxu0 0.0
        %432 = vmatprep.subr.mxu0 0.0
        %433 = vmatpush1.msra.mxu0 0.0
        %434 = vmatprep.subr.mxu0 0.0
        %435 = vmatpush1.msra.mxu0 0.0
        %436 = vmatprep.subr.mxu0 0.0
        %437 = vmatpush1.msra.mxu0 0.0
        %438 = vmatprep.subr.mxu0 0.0
        %439 = vmatpush1.msra.mxu0 0.0
        %440 = vmatprep.subr.mxu0 0.0
        %441 = vmatpush1.msra.mxu0 0.0
        %442 = vmatprep.subr.mxu0 0.0
        %443 = vmatpush1.msra.mxu0 0.0
        %444 = vmatprep.subr.mxu0 0.0
        %445 = vmatpush1.msra.mxu0 0.0
        %446 = vmatprep.subr.mxu0 0.0
        %447 = vmatpush1.msra.mxu0 0.0
        %448 = vmatprep.subr.mxu0 0.0
        %449 = vmatpush1.msra.mxu0 0.0
        %450 = vmatprep.subr.mxu0 0.0
        %451 = vmatpush1.msra.mxu0 0.0
        %452 = vmatprep.mubr.f32.mxu0 0.0
        %v453 = vand.u32 %v368, 4294901760
        %v454 = vsub.f32 %v368, %v453
        %v455 = vand.u32 %v454, 4294901760
        %v456 = vsub.f32 %v454, %v455
        %v457 = vand.u32 %v456, 4294901760
        %458 = vmatmul.mubr.f32.gmra.mrb[0].mxu0 %v457
        %v459 = vpop.f32.mrb[0].mxu0
        %v460 = vadd.f32 0.0, %v459
        %v461 = vpop.f32.mrb[0].mxu0
        %v462 = vadd.f32 0.0, %v461
        %463 = vmatprep.mubr.f32.mxu0 0.0
        %v464 = vand.u32 %v370, 4294901760
        %v465 = vsub.f32 %v370, %v464
        %v466 = vand.u32 %v465, 4294901760
        %v467 = vsub.f32 %v465, %v466
        %v468 = vand.u32 %v467, 4294901760
        %469 = vmatmul.mubr.f32.gmra.mrb[0].mxu0 %v468
        %v470 = vpop.f32.mrb[0].mxu0
        %v471 = vadd.f32 0.0, %v470
        %v472 = vpop.f32.mrb[0].mxu0
        %v473 = vadd.f32 0.0, %v472
        %474 = vdwg.mxu0
        %v475 = vand.u32 %v343, 4294901760
        %v476 = vsub.f32 %v343, %v475
        %v477 = vand.u32 %v476, 4294901760
        %v478 = vsub.f32 %v476, %v477
        %v479 = vand.u32 %v478, 4294901760
        %480 = vmatprep.subr.mxu0 %v479
        %v481 = vand.u32 %v342, 4294901760
        %v482 = vsub.f32 %v342, %v481
        %v483 = vand.u32 %v482, 4294901760
        %v484 = vsub.f32 %v482, %v483
        %v485 = vand.u32 %v484, 4294901760
        %486 = vmatpush1.msra.mxu0 %v485
        %v487 = vand.u32 %v345, 4294901760
        %v488 = vsub.f32 %v345, %v487
        %v489 = vand.u32 %v488, 4294901760
        %v490 = vsub.f32 %v488, %v489
        %v491 = vand.u32 %v490, 4294901760
        %492 = vmatprep.subr.mxu0 %v491
        %v493 = vand.u32 %v344, 4294901760
        %v494 = vsub.f32 %v344, %v493
        %v495 = vand.u32 %v494, 4294901760
        %v496 = vsub.f32 %v494, %v495
        %v497 = vand.u32 %v496, 4294901760
        %498 = vmatpush1.msra.mxu0 %v497
        %v499 = vand.u32 %v347, 4294901760
        %v500 = vsub.f32 %v347, %v499
        %v501 = vand.u32 %v500, 4294901760
        %v502 = vsub.f32 %v500, %v501
        %v503 = vand.u32 %v502, 4294901760
        %504 = vmatprep.subr.mxu0 %v503
        %v505 = vand.u32 %v346, 4294901760
        %v506 = vsub.f32 %v346, %v505
        %v507 = vand.u32 %v506, 4294901760
        %v508 = vsub.f32 %v506, %v507
        %v509 = vand.u32 %v508, 4294901760
        %510 = vmatpush1.msra.mxu0 %v509
        %v511 = vand.u32 %v349, 4294901760
        %v512 = vsub.f32 %v349, %v511
        %v513 = vand.u32 %v512, 4294901760
        %v514 = vsub.f32 %v512, %v513
        %v515 = vand.u32 %v514, 4294901760
        %516 = vmatprep.subr.mxu0 %v515
        %v517 = vand.u32 %v348, 4294901760
        %v518 = vsub.f32 %v348, %v517
        %v519 = vand.u32 %v518, 4294901760
        %v520 = vsub.f32 %v518, %v519
        %v521 = vand.u32 %v520, 4294901760
        %522 = vmatpush1.msra.mxu0 %v521
        %v523 = vand.u32 %v351, 4294901760
        %v524 = vsub.f32 %v351, %v523
        %v525 = vand.u32 %v524, 4294901760
        %v526 = vsub.f32 %v524, %v525
        %v527 = vand.u32 %v526, 4294901760
        %528 = vmatprep.subr.mxu0 %v527
        %v529 = vand.u32 %v350, 4294901760
        %v530 = vsub.f32 %v350, %v529
        %v531 = vand.u32 %v530, 4294901760
        %v532 = vsub.f32 %v530, %v531
        %v533 = vand.u32 %v532, 4294901760
        %534 = vmatpush1.msra.mxu0 %v533
        %v535 = vand.u32 %v353, 4294901760
        %v536 = vsub.f32 %v353, %v535
        %v537 = vand.u32 %v536, 4294901760
        %v538 = vsub.f32 %v536, %v537
        %v539 = vand.u32 %v538, 4294901760
        %540 = vmatprep.subr.mxu0 %v539
        %v541 = vand.u32 %v352, 4294901760
        %v542 = vsub.f32 %v352, %v541
        %v543 = vand.u32 %v542, 4294901760
        %v544 = vsub.f32 %v542, %v543
        %v545 = vand.u32 %v544, 4294901760
        %546 = vmatpush1.msra.mxu0 %v545
        %v547 = vand.u32 %v355, 4294901760
        %v548 = vsub.f32 %v355, %v547
        %v549 = vand.u32 %v548, 4294901760
        %v550 = vsub.f32 %v548, %v549
        %v551 = vand.u32 %v550, 4294901760
        %552 = vmatprep.subr.mxu0 %v551
        %v553 = vand.u32 %v354, 4294901760
        %v554 = vsub.f32 %v354, %v553
        %v555 = vand.u32 %v554, 4294901760
        %v556 = vsub.f32 %v554, %v555
        %v557 = vand.u32 %v556, 4294901760
        %558 = vmatpush1.msra.mxu0 %v557
        %v559 = vand.u32 %v357, 4294901760
        %v560 = vsub.f32 %v357, %v559
        %v561 = vand.u32 %v560, 4294901760
        %v562 = vsub.f32 %v560, %v561
        %v563 = vand.u32 %v562, 4294901760
        %564 = vmatprep.subr.mxu0 %v563
        %v565 = vand.u32 %v356, 4294901760
        %v566 = vsub.f32 %v356, %v565
        %v567 = vand.u32 %v566, 4294901760
        %v568 = vsub.f32 %v566, %v567
        %v569 = vand.u32 %v568, 4294901760
        %570 = vmatpush1.msra.mxu0 %v569
        %571 = vmatprep.subr.mxu0 0.0
        %572 = vmatpush1.msra.mxu0 0.0
        %573 = vmatprep.subr.mxu0 0.0
        %574 = vmatpush1.msra.mxu0 0.0
        %575 = vmatprep.subr.mxu0 0.0
        %576 = vmatpush1.msra.mxu0 0.0
        %577 = vmatprep.subr.mxu0 0.0
        %578 = vmatpush1.msra.mxu0 0.0
        %579 = vmatprep.subr.mxu0 0.0
        %580 = vmatpush1.msra.mxu0 0.0
        %581 = vmatprep.subr.mxu0 0.0
        %582 = vmatpush1.msra.mxu0 0.0
        %583 = vmatprep.subr.mxu0 0.0
        %584 = vmatpush1.msra.mxu0 0.0
        %585 = vmatprep.subr.mxu0 0.0
        %586 = vmatpush1.msra.mxu0 0.0
        %587 = vmatprep.subr.mxu0 0.0
        %588 = vmatpush1.msra.mxu0 0.0
        %589 = vmatprep.subr.mxu0 0.0
        %590 = vmatpush1.msra.mxu0 0.0
        %591 = vmatprep.subr.mxu0 0.0
        %592 = vmatpush1.msra.mxu0 0.0
        %593 = vmatprep.subr.mxu0 0.0
        %594 = vmatpush1.msra.mxu0 0.0
        %595 = vmatprep.subr.mxu0 0.0
        %596 = vmatpush1.msra.mxu0 0.0
        %597 = vmatprep.subr.mxu0 0.0
        %598 = vmatpush1.msra.mxu0 0.0
        %599 = vmatprep.subr.mxu0 0.0
        %600 = vmatpush1.msra.mxu0 0.0
        %601 = vmatprep.subr.mxu0 0.0
        %602 = vmatpush1.msra.mxu0 0.0
        %603 = vmatprep.subr.mxu0 0.0
        %604 = vmatpush1.msra.mxu0 0.0
        %605 = vmatprep.subr.mxu0 0.0
        %606 = vmatpush1.msra.mxu0 0.0
        %607 = vmatprep.subr.mxu0 0.0
        %608 = vmatpush1.msra.mxu0 0.0
        %609 = vmatprep.subr.mxu0 0.0
        %610 = vmatpush1.msra.mxu0 0.0
        %611 = vmatprep.subr.mxu0 0.0
        %612 = vmatpush1.msra.mxu0 0.0
        %613 = vmatprep.subr.mxu0 0.0
        %614 = vmatpush1.msra.mxu0 0.0
        %615 = vmatprep.subr.mxu0 0.0
        %616 = vmatpush1.msra.mxu0 0.0
        %617 = vmatprep.subr.mxu0 0.0
        %618 = vmatpush1.msra.mxu0 0.0
        %619 = vmatprep.mubr.f32.mxu0 0.0
        %v620 = vand.u32 %v368, 4294901760
        %621 = vmatmul.mubr.f32.gmra.mrb[0].mxu0 %v620
        %v622 = vpop.f32.mrb[0].mxu0
        %v623 = vadd.f32 %v460, %v622
        %v624 = vpop.f32.mrb[0].mxu0
        %v625 = vadd.f32 %v462, %v624
        %626 = vmatprep.mubr.f32.mxu0 0.0
        %v627 = vand.u32 %v370, 4294901760
        %628 = vmatmul.mubr.f32.gmra.mrb[0].mxu0 %v627
        %v629 = vpop.f32.mrb[0].mxu0
        %v630 = vadd.f32 %v471, %v629
        %v631 = vpop.f32.mrb[0].mxu0
        %v632 = vadd.f32 %v473, %v631
        %633 = vdwg.mxu0
        %v634 = vand.u32 %v343, 4294901760
        %v635 = vsub.f32 %v343, %v634
        %636 = vmatprep.subr.mxu0 %v635
        %v637 = vand.u32 %v342, 4294901760
        %v638 = vsub.f32 %v342, %v637
        %639 = vmatpush1.msra.mxu0 %v638
        %v640 = vand.u32 %v345, 4294901760
        %v641 = vsub.f32 %v345, %v640
        %642 = vmatprep.subr.mxu0 %v641
        %v643 = vand.u32 %v344, 4294901760
        %v644 = vsub.f32 %v344, %v643
        %645 = vmatpush1.msra.mxu0 %v644
        %v646 = vand.u32 %v347, 4294901760
        %v647 = vsub.f32 %v347, %v646
        %648 = vmatprep.subr.mxu0 %v647
        %v649 = vand.u32 %v346, 4294901760
        %v650 = vsub.f32 %v346, %v649
        %651 = vmatpush1.msra.mxu0 %v650
        %v652 = vand.u32 %v349, 4294901760
        %v653 = vsub.f32 %v349, %v652
        %654 = vmatprep.subr.mxu0 %v653
        %v655 = vand.u32 %v348, 4294901760
        %v656 = vsub.f32 %v348, %v655
        %657 = vmatpush1.msra.mxu0 %v656
        %v658 = vand.u32 %v351, 4294901760
        %v659 = vsub.f32 %v351, %v658
        %660 = vmatprep.subr.mxu0 %v659
        %v661 = vand.u32 %v350, 4294901760
        %v662 = vsub.f32 %v350, %v661
        %663 = vmatpush1.msra.mxu0 %v662
        %v664 = vand.u32 %v353, 4294901760
        %v665 = vsub.f32 %v353, %v664
        %666 = vmatprep.subr.mxu0 %v665
        %v667 = vand.u32 %v352, 4294901760
        %v668 = vsub.f32 %v352, %v667
        %669 = vmatpush1.msra.mxu0 %v668
        %v670 = vand.u32 %v355, 4294901760
        %v671 = vsub.f32 %v355, %v670
        %672 = vmatprep.subr.mxu0 %v671
        %v673 = vand.u32 %v354, 4294901760
        %v674 = vsub.f32 %v354, %v673
        %675 = vmatpush1.msra.mxu0 %v674
        %v676 = vand.u32 %v357, 4294901760
        %v677 = vsub.f32 %v357, %v676
        %678 = vmatprep.subr.mxu0 %v677
        %v679 = vand.u32 %v356, 4294901760
        %v680 = vsub.f32 %v356, %v679
        %681 = vmatpush1.msra.mxu0 %v680
        %682 = vmatprep.subr.mxu0 0.0
        %683 = vmatpush1.msra.mxu0 0.0
        %684 = vmatprep.subr.mxu0 0.0
        %685 = vmatpush1.msra.mxu0 0.0
        %686 = vmatprep.subr.mxu0 0.0
        %687 = vmatpush1.msra.mxu0 0.0
        %688 = vmatprep.subr.mxu0 0.0
        %689 = vmatpush1.msra.mxu0 0.0
        %690 = vmatprep.subr.mxu0 0.0
        %691 = vmatpush1.msra.mxu0 0.0
        %692 = vmatprep.subr.mxu0 0.0
        %693 = vmatpush1.msra.mxu0 0.0
        %694 = vmatprep.subr.mxu0 0.0
        %695 = vmatpush1.msra.mxu0 0.0
        %696 = vmatprep.subr.mxu0 0.0
        %697 = vmatpush1.msra.mxu0 0.0
        %698 = vmatprep.subr.mxu0 0.0
        %699 = vmatpush1.msra.mxu0 0.0
        %700 = vmatprep.subr.mxu0 0.0
        %701 = vmatpush1.msra.mxu0 0.0
        %702 = vmatprep.subr.mxu0 0.0
        %703 = vmatpush1.msra.mxu0 0.0
        %704 = vmatprep.subr.mxu0 0.0
        %705 = vmatpush1.msra.mxu0 0.0
        %706 = vmatprep.subr.mxu0 0.0
        %707 = vmatpush1.msra.mxu0 0.0
        %708 = vmatprep.subr.mxu0 0.0
        %709 = vmatpush1.msra.mxu0 0.0
        %710 = vmatprep.subr.mxu0 0.0
        %711 = vmatpush1.msra.mxu0 0.0
        %712 = vmatprep.subr.mxu0 0.0
        %713 = vmatpush1.msra.mxu0 0.0
        %714 = vmatprep.subr.mxu0 0.0
        %715 = vmatpush1.msra.mxu0 0.0
        %716 = vmatprep.subr.mxu0 0.0
        %717 = vmatpush1.msra.mxu0 0.0
        %718 = vmatprep.subr.mxu0 0.0
        %719 = vmatpush1.msra.mxu0 0.0
        %720 = vmatprep.subr.mxu0 0.0
        %721 = vmatpush1.msra.mxu0 0.0
        %722 = vmatprep.subr.mxu0 0.0
        %723 = vmatpush1.msra.mxu0 0.0
        %724 = vmatprep.subr.mxu0 0.0
        %725 = vmatpush1.msra.mxu0 0.0
        %726 = vmatprep.subr.mxu0 0.0
        %727 = vmatpush1.msra.mxu0 0.0
        %728 = vmatprep.subr.mxu0 0.0
        %729 = vmatpush1.msra.mxu0 0.0
        %730 = vmatprep.mubr.f32.mxu0 0.0
        %v731 = vand.u32 %v368, 4294901760
        %v732 = vsub.f32 %v368, %v731
        %733 = vmatmul.mubr.f32.gmra.mrb[0].mxu0 %v732
        %v734 = vpop.f32.mrb[0].mxu0
        %v735 = vadd.f32 %v623, %v734
        %v736 = vpop.f32.mrb[0].mxu0
        %v737 = vadd.f32 %v625, %v736
        %738 = vmatprep.mubr.f32.mxu0 0.0
        %v739 = vand.u32 %v370, 4294901760
        %v740 = vsub.f32 %v370, %v739
        %741 = vmatmul.mubr.f32.gmra.mrb[0].mxu0 %v740
        %v742 = vpop.f32.mrb[0].mxu0
        %v743 = vadd.f32 %v630, %v742
        %v744 = vpop.f32.mrb[0].mxu0
        %v745 = vadd.f32 %v632, %v744
        %746 = vdwg.mxu0
        %v747 = vand.u32 %v343, 4294901760
        %748 = vmatprep.subr.mxu0 %v747
        %v749 = vand.u32 %v342, 4294901760
        %750 = vmatpush1.msra.mxu0 %v749
        %v751 = vand.u32 %v345, 4294901760
        %752 = vmatprep.subr.mxu0 %v751
        %v753 = vand.u32 %v344, 4294901760
        %754 = vmatpush1.msra.mxu0 %v753
        %v755 = vand.u32 %v347, 4294901760
        %756 = vmatprep.subr.mxu0 %v755
        %v757 = vand.u32 %v346, 4294901760
        %758 = vmatpush1.msra.mxu0 %v757
        %v759 = vand.u32 %v349, 4294901760
        %760 = vmatprep.subr.mxu0 %v759
        %v761 = vand.u32 %v348, 4294901760
        %762 = vmatpush1.msra.mxu0 %v761
        %v763 = vand.u32 %v351, 4294901760
        %764 = vmatprep.subr.mxu0 %v763
        %v765 = vand.u32 %v350, 4294901760
        %766 = vmatpush1.msra.mxu0 %v765
        %v767 = vand.u32 %v353, 4294901760
        %768 = vmatprep.subr.mxu0 %v767
        %v769 = vand.u32 %v352, 4294901760
        %770 = vmatpush1.msra.mxu0 %v769
        %v771 = vand.u32 %v355, 4294901760
        %772 = vmatprep.subr.mxu0 %v771
        %v773 = vand.u32 %v354, 4294901760
        %774 = vmatpush1.msra.mxu0 %v773
        %v775 = vand.u32 %v357, 4294901760
        %776 = vmatprep.subr.mxu0 %v775
        %v777 = vand.u32 %v356, 4294901760
        %778 = vmatpush1.msra.mxu0 %v777
        %779 = vmatprep.subr.mxu0 0.0
        %780 = vmatpush1.msra.mxu0 0.0
        %781 = vmatprep.subr.mxu0 0.0
        %782 = vmatpush1.msra.mxu0 0.0
        %783 = vmatprep.subr.mxu0 0.0
        %784 = vmatpush1.msra.mxu0 0.0
        %785 = vmatprep.subr.mxu0 0.0
        %786 = vmatpush1.msra.mxu0 0.0
        %787 = vmatprep.subr.mxu0 0.0
        %788 = vmatpush1.msra.mxu0 0.0
        %789 = vmatprep.subr.mxu0 0.0
        %790 = vmatpush1.msra.mxu0 0.0
        %791 = vmatprep.subr.mxu0 0.0
        %792 = vmatpush1.msra.mxu0 0.0
        %793 = vmatprep.subr.mxu0 0.0
        %794 = vmatpush1.msra.mxu0 0.0
        %795 = vmatprep.subr.mxu0 0.0
        %796 = vmatpush1.msra.mxu0 0.0
        %797 = vmatprep.subr.mxu0 0.0
        %798 = vmatpush1.msra.mxu0 0.0
        %799 = vmatprep.subr.mxu0 0.0
        %800 = vmatpush1.msra.mxu0 0.0
        %801 = vmatprep.subr.mxu0 0.0
        %802 = vmatpush1.msra.mxu0 0.0
        %803 = vmatprep.subr.mxu0 0.0
        %804 = vmatpush1.msra.mxu0 0.0
        %805 = vmatprep.subr.mxu0 0.0
        %806 = vmatpush1.msra.mxu0 0.0
        %807 = vmatprep.subr.mxu0 0.0
        %808 = vmatpush1.msra.mxu0 0.0
        %809 = vmatprep.subr.mxu0 0.0
        %810 = vmatpush1.msra.mxu0 0.0
        %811 = vmatprep.subr.mxu0 0.0
        %812 = vmatpush1.msra.mxu0 0.0
        %813 = vmatprep.subr.mxu0 0.0
        %814 = vmatpush1.msra.mxu0 0.0
        %815 = vmatprep.subr.mxu0 0.0
        %816 = vmatpush1.msra.mxu0 0.0
        %817 = vmatprep.subr.mxu0 0.0
        %818 = vmatpush1.msra.mxu0 0.0
        %819 = vmatprep.subr.mxu0 0.0
        %820 = vmatpush1.msra.mxu0 0.0
        %821 = vmatprep.subr.mxu0 0.0
        %822 = vmatpush1.msra.mxu0 0.0
        %823 = vmatprep.subr.mxu0 0.0
        %824 = vmatpush1.msra.mxu0 0.0
        %825 = vmatprep.subr.mxu0 0.0
        %826 = vmatpush1.msra.mxu0 0.0
        %827 = vmatprep.mubr.f32.mxu0 0.0
        %v828 = vand.u32 %v368, 4294901760
        %v829 = vsub.f32 %v368, %v828
        %v830 = vand.u32 %v829, 4294901760
        %831 = vmatmul.mubr.f32.gmra.mrb[0].mxu0 %v830
        %v832 = vpop.f32.mrb[0].mxu0
        %v833 = vadd.f32 %v735, %v832
        %v834 = vpop.f32.mrb[0].mxu0
        %v835 = vadd.f32 %v737, %v834
        %836 = vmatprep.mubr.f32.mxu0 0.0
        %v837 = vand.u32 %v370, 4294901760
        %v838 = vsub.f32 %v370, %v837
        %v839 = vand.u32 %v838, 4294901760
        %840 = vmatmul.mubr.f32.gmra.mrb[0].mxu0 %v839
        %v841 = vpop.f32.mrb[0].mxu0
        %v842 = vadd.f32 %v743, %v841
        %v843 = vpop.f32.mrb[0].mxu0
        %v844 = vadd.f32 %v745, %v843
        %845 = vdwg.mxu0
        %v846 = vand.u32 %v343, 4294901760
        %v847 = vsub.f32 %v343, %v846
        %v848 = vand.u32 %v847, 4294901760
        %849 = vmatprep.subr.mxu0 %v848
        %v850 = vand.u32 %v342, 4294901760
        %v851 = vsub.f32 %v342, %v850
        %v852 = vand.u32 %v851, 4294901760
        %853 = vmatpush1.msra.mxu0 %v852
        %v854 = vand.u32 %v345, 4294901760
        %v855 = vsub.f32 %v345, %v854
        %v856 = vand.u32 %v855, 4294901760
        %857 = vmatprep.subr.mxu0 %v856
        %v858 = vand.u32 %v344, 4294901760
        %v859 = vsub.f32 %v344, %v858
        %v860 = vand.u32 %v859, 4294901760
        %861 = vmatpush1.msra.mxu0 %v860
        %v862 = vand.u32 %v347, 4294901760
        %v863 = vsub.f32 %v347, %v862
        %v864 = vand.u32 %v863, 4294901760
        %865 = vmatprep.subr.mxu0 %v864
        %v866 = vand.u32 %v346, 4294901760
        %v867 = vsub.f32 %v346, %v866
        %v868 = vand.u32 %v867, 4294901760
        %869 = vmatpush1.msra.mxu0 %v868
        %v870 = vand.u32 %v349, 4294901760
        %v871 = vsub.f32 %v349, %v870
        %v872 = vand.u32 %v871, 4294901760
        %873 = vmatprep.subr.mxu0 %v872
        %v874 = vand.u32 %v348, 4294901760
        %v875 = vsub.f32 %v348, %v874
        %v876 = vand.u32 %v875, 4294901760
        %877 = vmatpush1.msra.mxu0 %v876
        %v878 = vand.u32 %v351, 4294901760
        %v879 = vsub.f32 %v351, %v878
        %v880 = vand.u32 %v879, 4294901760
        %881 = vmatprep.subr.mxu0 %v880
        %v882 = vand.u32 %v350, 4294901760
        %v883 = vsub.f32 %v350, %v882
        %v884 = vand.u32 %v883, 4294901760
        %885 = vmatpush1.msra.mxu0 %v884
        %v886 = vand.u32 %v353, 4294901760
        %v887 = vsub.f32 %v353, %v886
        %v888 = vand.u32 %v887, 4294901760
        %889 = vmatprep.subr.mxu0 %v888
        %v890 = vand.u32 %v352, 4294901760
        %v891 = vsub.f32 %v352, %v890
        %v892 = vand.u32 %v891, 4294901760
        %893 = vmatpush1.msra.mxu0 %v892
        %v894 = vand.u32 %v355, 4294901760
        %v895 = vsub.f32 %v355, %v894
        %v896 = vand.u32 %v895, 4294901760
        %897 = vmatprep.subr.mxu0 %v896
        %v898 = vand.u32 %v354, 4294901760
        %v899 = vsub.f32 %v354, %v898
        %v900 = vand.u32 %v899, 4294901760
        %901 = vmatpush1.msra.mxu0 %v900
        %v902 = vand.u32 %v357, 4294901760
        %v903 = vsub.f32 %v357, %v902
        %v904 = vand.u32 %v903, 4294901760
        %905 = vmatprep.subr.mxu0 %v904
        %v906 = vand.u32 %v356, 4294901760
        %v907 = vsub.f32 %v356, %v906
        %v908 = vand.u32 %v907, 4294901760
        %909 = vmatpush1.msra.mxu0 %v908
        %910 = vmatprep.subr.mxu0 0.0
        %911 = vmatpush1.msra.mxu0 0.0
        %912 = vmatprep.subr.mxu0 0.0
        %913 = vmatpush1.msra.mxu0 0.0
        %914 = vmatprep.subr.mxu0 0.0
        %915 = vmatpush1.msra.mxu0 0.0
        %916 = vmatprep.subr.mxu0 0.0
        %917 = vmatpush1.msra.mxu0 0.0
        %918 = vmatprep.subr.mxu0 0.0
        %919 = vmatpush1.msra.mxu0 0.0
        %920 = vmatprep.subr.mxu0 0.0
        %921 = vmatpush1.msra.mxu0 0.0
        %922 = vmatprep.subr.mxu0 0.0
        %923 = vmatpush1.msra.mxu0 0.0
        %924 = vmatprep.subr.mxu0 0.0
        %925 = vmatpush1.msra.mxu0 0.0
        %926 = vmatprep.subr.mxu0 0.0
        %927 = vmatpush1.msra.mxu0 0.0
        %928 = vmatprep.subr.mxu0 0.0
        %929 = vmatpush1.msra.mxu0 0.0
        %930 = vmatprep.subr.mxu0 0.0
        %931 = vmatpush1.msra.mxu0 0.0
        %932 = vmatprep.subr.mxu0 0.0
        %933 = vmatpush1.msra.mxu0 0.0
        %934 = vmatprep.subr.mxu0 0.0
        %935 = vmatpush1.msra.mxu0 0.0
        %936 = vmatprep.subr.mxu0 0.0
        %937 = vmatpush1.msra.mxu0 0.0
        %938 = vmatprep.subr.mxu0 0.0
        %939 = vmatpush1.msra.mxu0 0.0
        %940 = vmatprep.subr.mxu0 0.0
        %941 = vmatpush1.msra.mxu0 0.0
        %942 = vmatprep.subr.mxu0 0.0
        %943 = vmatpush1.msra.mxu0 0.0
        %944 = vmatprep.subr.mxu0 0.0
        %945 = vmatpush1.msra.mxu0 0.0
        %946 = vmatprep.subr.mxu0 0.0
        %947 = vmatpush1.msra.mxu0 0.0
        %948 = vmatprep.subr.mxu0 0.0
        %949 = vmatpush1.msra.mxu0 0.0
        %950 = vmatprep.subr.mxu0 0.0
        %951 = vmatpush1.msra.mxu0 0.0
        %952 = vmatprep.subr.mxu0 0.0
        %953 = vmatpush1.msra.mxu0 0.0
        %954 = vmatprep.subr.mxu0 0.0
        %955 = vmatpush1.msra.mxu0 0.0
        %956 = vmatprep.subr.mxu0 0.0
        %957 = vmatpush1.msra.mxu0 0.0
        %958 = vmatprep.mubr.f32.mxu0 0.0
        %v959 = vand.u32 %v368, 4294901760
        %960 = vmatmul.mubr.f32.gmra.mrb[0].mxu0 %v959
        %v961 = vpop.f32.mrb[0].mxu0
        %v962 = vadd.f32 %v833, %v961
        %v963 = vpop.f32.mrb[0].mxu0
        %v964 = vadd.f32 %v835, %v963
        %965 = vmatprep.mubr.f32.mxu0 0.0
        %v966 = vand.u32 %v370, 4294901760
        %967 = vmatmul.mubr.f32.gmra.mrb[0].mxu0 %v966
        %v968 = vpop.f32.mrb[0].mxu0
        %v969 = vadd.f32 %v842, %v968
        %v970 = vpop.f32.mrb[0].mxu0
        %v971 = vadd.f32 %v844, %v970
        %972 = vdwg.mxu0
        %v973 = vand.u32 %v343, 4294901760
        %974 = vmatprep.subr.mxu0 %v973
        %v975 = vand.u32 %v342, 4294901760
        %976 = vmatpush1.msra.mxu0 %v975
        %v977 = vand.u32 %v345, 4294901760
        %978 = vmatprep.subr.mxu0 %v977
        %v979 = vand.u32 %v344, 4294901760
        %980 = vmatpush1.msra.mxu0 %v979
        %v981 = vand.u32 %v347, 4294901760
        %982 = vmatprep.subr.mxu0 %v981
        %v983 = vand.u32 %v346, 4294901760
        %984 = vmatpush1.msra.mxu0 %v983
        %v985 = vand.u32 %v349, 4294901760
        %986 = vmatprep.subr.mxu0 %v985
        %v987 = vand.u32 %v348, 4294901760
        %988 = vmatpush1.msra.mxu0 %v987
        %v989 = vand.u32 %v351, 4294901760
        %990 = vmatprep.subr.mxu0 %v989
        %v991 = vand.u32 %v350, 4294901760
        %992 = vmatpush1.msra.mxu0 %v991
        %v993 = vand.u32 %v353, 4294901760
        %994 = vmatprep.subr.mxu0 %v993
        %v995 = vand.u32 %v352, 4294901760
        %996 = vmatpush1.msra.mxu0 %v995
        %v997 = vand.u32 %v355, 4294901760
        %998 = vmatprep.subr.mxu0 %v997
        %v999 = vand.u32 %v354, 4294901760
        %1000 = vmatpush1.msra.mxu0 %v999
        %v1001 = vand.u32 %v357, 4294901760
        %1002 = vmatprep.subr.mxu0 %v1001
        %v1003 = vand.u32 %v356, 4294901760
        %1004 = vmatpush1.msra.mxu0 %v1003
        %1005 = vmatprep.subr.mxu0 0.0
        %1006 = vmatpush1.msra.mxu0 0.0
        %1007 = vmatprep.subr.mxu0 0.0
        %1008 = vmatpush1.msra.mxu0 0.0
        %1009 = vmatprep.subr.mxu0 0.0
        %1010 = vmatpush1.msra.mxu0 0.0
        %1011 = vmatprep.subr.mxu0 0.0
        %1012 = vmatpush1.msra.mxu0 0.0
        %1013 = vmatprep.subr.mxu0 0.0
        %1014 = vmatpush1.msra.mxu0 0.0
        %1015 = vmatprep.subr.mxu0 0.0
        %1016 = vmatpush1.msra.mxu0 0.0
        %1017 = vmatprep.subr.mxu0 0.0
        %1018 = vmatpush1.msra.mxu0 0.0
        %1019 = vmatprep.subr.mxu0 0.0
        %1020 = vmatpush1.msra.mxu0 0.0
        %1021 = vmatprep.subr.mxu0 0.0
        %1022 = vmatpush1.msra.mxu0 0.0
        %1023 = vmatprep.subr.mxu0 0.0
        %1024 = vmatpush1.msra.mxu0 0.0
        %1025 = vmatprep.subr.mxu0 0.0
        %1026 = vmatpush1.msra.mxu0 0.0
        %1027 = vmatprep.subr.mxu0 0.0
        %1028 = vmatpush1.msra.mxu0 0.0
        %1029 = vmatprep.subr.mxu0 0.0
        %1030 = vmatpush1.msra.mxu0 0.0
        %1031 = vmatprep.subr.mxu0 0.0
        %1032 = vmatpush1.msra.mxu0 0.0
        %1033 = vmatprep.subr.mxu0 0.0
        %1034 = vmatpush1.msra.mxu0 0.0
        %1035 = vmatprep.subr.mxu0 0.0
        %1036 = vmatpush1.msra.mxu0 0.0
        %1037 = vmatprep.subr.mxu0 0.0
        %1038 = vmatpush1.msra.mxu0 0.0
        %1039 = vmatprep.subr.mxu0 0.0
        %1040 = vmatpush1.msra.mxu0 0.0
        %1041 = vmatprep.subr.mxu0 0.0
        %1042 = vmatpush1.msra.mxu0 0.0
        %1043 = vmatprep.subr.mxu0 0.0
        %1044 = vmatpush1.msra.mxu0 0.0
        %1045 = vmatprep.subr.mxu0 0.0
        %1046 = vmatpush1.msra.mxu0 0.0
        %1047 = vmatprep.subr.mxu0 0.0
        %1048 = vmatpush1.msra.mxu0 0.0
        %1049 = vmatprep.subr.mxu0 0.0
        %1050 = vmatpush1.msra.mxu0 0.0
        %1051 = vmatprep.subr.mxu0 0.0
        %1052 = vmatpush1.msra.mxu0 0.0
        %1053 = vmatprep.mubr.f32.mxu0 0.0
        %v1054 = vand.u32 %v368, 4294901760
        %1055 = vmatmul.mubr.f32.gmra.mrb[0].mxu0 %v1054
        %v1056 = vpop.f32.mrb[0].mxu0
        %v1057 = vadd.f32 %v962, %v1056
        %v1058 = vpop.f32.mrb[0].mxu0
        %v1059 = vadd.f32 %v964, %v1058
        %1060 = vmatprep.mubr.f32.mxu0 0.0
        %v1061 = vand.u32 %v370, 4294901760
        %1062 = vmatmul.mubr.f32.gmra.mrb[0].mxu0 %v1061
        %v1063 = vpop.f32.mrb[0].mxu0
        %v1064 = vadd.f32 %v969, %v1063
        %v1065 = vpop.f32.mrb[0].mxu0
        %v1066 = vadd.f32 %v971, %v1065
        %1067 = vdwg.mxu0
        %v1068 = vsel %vm367, %v322, 0
        %v1070 = vsel %vm367, %v323, 0
        %v1072 = vand.u32 %v326, 4294901760
        %1073 = vmatprep.subr.mxu0 %v1072
        %v1074 = vand.u32 %v325, 4294901760
        %1075 = vmatpush1.msra.mxu0 %v1074
        %v1076 = vand.u32 %v328, 4294901760
        %1077 = vmatprep.subr.mxu0 %v1076
        %v1078 = vand.u32 %v327, 4294901760
        %1079 = vmatpush1.msra.mxu0 %v1078
        %v1080 = vand.u32 %v330, 4294901760
        %1081 = vmatprep.subr.mxu0 %v1080
        %v1082 = vand.u32 %v329, 4294901760
        %1083 = vmatpush1.msra.mxu0 %v1082
        %v1084 = vand.u32 %v332, 4294901760
        %1085 = vmatprep.subr.mxu0 %v1084
        %v1086 = vand.u32 %v331, 4294901760
        %1087 = vmatpush1.msra.mxu0 %v1086
        %v1088 = vand.u32 %v334, 4294901760
        %1089 = vmatprep.subr.mxu0 %v1088
        %v1090 = vand.u32 %v333, 4294901760
        %1091 = vmatpush1.msra.mxu0 %v1090
        %v1092 = vand.u32 %v336, 4294901760
        %1093 = vmatprep.subr.mxu0 %v1092
        %v1094 = vand.u32 %v335, 4294901760
        %1095 = vmatpush1.msra.mxu0 %v1094
        %v1096 = vand.u32 %v338, 4294901760
        %1097 = vmatprep.subr.mxu0 %v1096
        %v1098 = vand.u32 %v337, 4294901760
        %1099 = vmatpush1.msra.mxu0 %v1098
        %v1100 = vand.u32 %v340, 4294901760
        %1101 = vmatprep.subr.mxu0 %v1100
        %v1102 = vand.u32 %v339, 4294901760
        %1103 = vmatpush1.msra.mxu0 %v1102
        %1104 = vmatprep.subr.mxu0 0.0
        %1105 = vmatpush1.msra.mxu0 0.0
        %1106 = vmatprep.subr.mxu0 0.0
        %1107 = vmatpush1.msra.mxu0 0.0
        %1108 = vmatprep.subr.mxu0 0.0
        %1109 = vmatpush1.msra.mxu0 0.0
        %1110 = vmatprep.subr.mxu0 0.0
        %1111 = vmatpush1.msra.mxu0 0.0
        %1112 = vmatprep.subr.mxu0 0.0
        %1113 = vmatpush1.msra.mxu0 0.0
        %1114 = vmatprep.subr.mxu0 0.0
        %1115 = vmatpush1.msra.mxu0 0.0
        %1116 = vmatprep.subr.mxu0 0.0
        %1117 = vmatpush1.msra.mxu0 0.0
        %1118 = vmatprep.subr.mxu0 0.0
        %1119 = vmatpush1.msra.mxu0 0.0
        %1120 = vmatprep.subr.mxu0 0.0
        %1121 = vmatpush1.msra.mxu0 0.0
        %1122 = vmatprep.subr.mxu0 0.0
        %1123 = vmatpush1.msra.mxu0 0.0
        %1124 = vmatprep.subr.mxu0 0.0
        %1125 = vmatpush1.msra.mxu0 0.0
        %1126 = vmatprep.subr.mxu0 0.0
        %1127 = vmatpush1.msra.mxu0 0.0
        %1128 = vmatprep.subr.mxu0 0.0
        %1129 = vmatpush1.msra.mxu0 0.0
        %1130 = vmatprep.subr.mxu0 0.0
        %1131 = vmatpush1.msra.mxu0 0.0
        %1132 = vmatprep.subr.mxu0 0.0
        %1133 = vmatpush1.msra.mxu0 0.0
        %1134 = vmatprep.subr.mxu0 0.0
        %1135 = vmatpush1.msra.mxu0 0.0
        %1136 = vmatprep.subr.mxu0 0.0
        %1137 = vmatpush1.msra.mxu0 0.0
        %1138 = vmatprep.subr.mxu0 0.0
        %1139 = vmatpush1.msra.mxu0 0.0
        %1140 = vmatprep.subr.mxu0 0.0
        %1141 = vmatpush1.msra.mxu0 0.0
        %1142 = vmatprep.subr.mxu0 0.0
        %1143 = vmatpush1.msra.mxu0 0.0
        %1144 = vmatprep.subr.mxu0 0.0
        %1145 = vmatpush1.msra.mxu0 0.0
        %1146 = vmatprep.subr.mxu0 0.0
        %1147 = vmatpush1.msra.mxu0 0.0
        %1148 = vmatprep.subr.mxu0 0.0
        %1149 = vmatpush1.msra.mxu0 0.0
        %1150 = vmatprep.subr.mxu0 0.0
        %1151 = vmatpush1.msra.mxu0 0.0
        %1152 = vmatprep.mubr.f32.mxu0 0.0
        %v1153 = vand.u32 %v1068, 4294901760
        %v1154 = vsub.f32 %v1068, %v1153
        %v1155 = vand.u32 %v1154, 4294901760
        %v1156 = vsub.f32 %v1154, %v1155
        %v1157 = vand.u32 %v1156, 4294901760
        %1158 = vmatmul.mubr.f32.gmra.mrb[0].mxu0 %v1157
        %v1159 = vpop.f32.mrb[0].mxu0
        %v1160 = vadd.f32 %v1057, %v1159
        %v1161 = vpop.f32.mrb[0].mxu0
        %v1162 = vadd.f32 %v1059, %v1161
        %1163 = vmatprep.mubr.f32.mxu0 0.0
        %v1164 = vand.u32 %v1070, 4294901760
        %v1165 = vsub.f32 %v1070, %v1164
        %v1166 = vand.u32 %v1165, 4294901760
        %v1167 = vsub.f32 %v1165, %v1166
        %v1168 = vand.u32 %v1167, 4294901760
        %1169 = vmatmul.mubr.f32.gmra.mrb[0].mxu0 %v1168
        %v1170 = vpop.f32.mrb[0].mxu0
        %v1171 = vadd.f32 %v1064, %v1170
        %v1172 = vpop.f32.mrb[0].mxu0
        %v1173 = vadd.f32 %v1066, %v1172
        %1174 = vdwg.mxu0
        %v1175 = vand.u32 %v326, 4294901760
        %v1176 = vsub.f32 %v326, %v1175
        %v1177 = vand.u32 %v1176, 4294901760
        %v1178 = vsub.f32 %v1176, %v1177
        %v1179 = vand.u32 %v1178, 4294901760
        %1180 = vmatprep.subr.mxu0 %v1179
        %v1181 = vand.u32 %v325, 4294901760
        %v1182 = vsub.f32 %v325, %v1181
        %v1183 = vand.u32 %v1182, 4294901760
        %v1184 = vsub.f32 %v1182, %v1183
        %v1185 = vand.u32 %v1184, 4294901760
        %1186 = vmatpush1.msra.mxu0 %v1185
        %v1187 = vand.u32 %v328, 4294901760
        %v1188 = vsub.f32 %v328, %v1187
        %v1189 = vand.u32 %v1188, 4294901760
        %v1190 = vsub.f32 %v1188, %v1189
        %v1191 = vand.u32 %v1190, 4294901760
        %1192 = vmatprep.subr.mxu0 %v1191
        %v1193 = vand.u32 %v327, 4294901760
        %v1194 = vsub.f32 %v327, %v1193
        %v1195 = vand.u32 %v1194, 4294901760
        %v1196 = vsub.f32 %v1194, %v1195
        %v1197 = vand.u32 %v1196, 4294901760
        %1198 = vmatpush1.msra.mxu0 %v1197
        %v1199 = vand.u32 %v330, 4294901760
        %v1200 = vsub.f32 %v330, %v1199
        %v1201 = vand.u32 %v1200, 4294901760
        %v1202 = vsub.f32 %v1200, %v1201
        %v1203 = vand.u32 %v1202, 4294901760
        %1204 = vmatprep.subr.mxu0 %v1203
        %v1205 = vand.u32 %v329, 4294901760
        %v1206 = vsub.f32 %v329, %v1205
        %v1207 = vand.u32 %v1206, 4294901760
        %v1208 = vsub.f32 %v1206, %v1207
        %v1209 = vand.u32 %v1208, 4294901760
        %1210 = vmatpush1.msra.mxu0 %v1209
        %v1211 = vand.u32 %v332, 4294901760
        %v1212 = vsub.f32 %v332, %v1211
        %v1213 = vand.u32 %v1212, 4294901760
        %v1214 = vsub.f32 %v1212, %v1213
        %v1215 = vand.u32 %v1214, 4294901760
        %1216 = vmatprep.subr.mxu0 %v1215
        %v1217 = vand.u32 %v331, 4294901760
        %v1218 = vsub.f32 %v331, %v1217
        %v1219 = vand.u32 %v1218, 4294901760
        %v1220 = vsub.f32 %v1218, %v1219
        %v1221 = vand.u32 %v1220, 4294901760
        %1222 = vmatpush1.msra.mxu0 %v1221
        %v1223 = vand.u32 %v334, 4294901760
        %v1224 = vsub.f32 %v334, %v1223
        %v1225 = vand.u32 %v1224, 4294901760
        %v1226 = vsub.f32 %v1224, %v1225
        %v1227 = vand.u32 %v1226, 4294901760
        %1228 = vmatprep.subr.mxu0 %v1227
        %v1229 = vand.u32 %v333, 4294901760
        %v1230 = vsub.f32 %v333, %v1229
        %v1231 = vand.u32 %v1230, 4294901760
        %v1232 = vsub.f32 %v1230, %v1231
        %v1233 = vand.u32 %v1232, 4294901760
        %1234 = vmatpush1.msra.mxu0 %v1233
        %v1235 = vand.u32 %v336, 4294901760
        %v1236 = vsub.f32 %v336, %v1235
        %v1237 = vand.u32 %v1236, 4294901760
        %v1238 = vsub.f32 %v1236, %v1237
        %v1239 = vand.u32 %v1238, 4294901760
        %1240 = vmatprep.subr.mxu0 %v1239
        %v1241 = vand.u32 %v335, 4294901760
        %v1242 = vsub.f32 %v335, %v1241
        %v1243 = vand.u32 %v1242, 4294901760
        %v1244 = vsub.f32 %v1242, %v1243
        %v1245 = vand.u32 %v1244, 4294901760
        %1246 = vmatpush1.msra.mxu0 %v1245
        %v1247 = vand.u32 %v338, 4294901760
        %v1248 = vsub.f32 %v338, %v1247
        %v1249 = vand.u32 %v1248, 4294901760
        %v1250 = vsub.f32 %v1248, %v1249
        %v1251 = vand.u32 %v1250, 4294901760
        %1252 = vmatprep.subr.mxu0 %v1251
        %v1253 = vand.u32 %v337, 4294901760
        %v1254 = vsub.f32 %v337, %v1253
        %v1255 = vand.u32 %v1254, 4294901760
        %v1256 = vsub.f32 %v1254, %v1255
        %v1257 = vand.u32 %v1256, 4294901760
        %1258 = vmatpush1.msra.mxu0 %v1257
        %v1259 = vand.u32 %v340, 4294901760
        %v1260 = vsub.f32 %v340, %v1259
        %v1261 = vand.u32 %v1260, 4294901760
        %v1262 = vsub.f32 %v1260, %v1261
        %v1263 = vand.u32 %v1262, 4294901760
        %1264 = vmatprep.subr.mxu0 %v1263
        %v1265 = vand.u32 %v339, 4294901760
        %v1266 = vsub.f32 %v339, %v1265
        %v1267 = vand.u32 %v1266, 4294901760
        %v1268 = vsub.f32 %v1266, %v1267
        %v1269 = vand.u32 %v1268, 4294901760
        %1270 = vmatpush1.msra.mxu0 %v1269
        %1271 = vmatprep.subr.mxu0 0.0
        %1272 = vmatpush1.msra.mxu0 0.0
        %1273 = vmatprep.subr.mxu0 0.0
        %1274 = vmatpush1.msra.mxu0 0.0
        %1275 = vmatprep.subr.mxu0 0.0
        %1276 = vmatpush1.msra.mxu0 0.0
        %1277 = vmatprep.subr.mxu0 0.0
        %1278 = vmatpush1.msra.mxu0 0.0
        %1279 = vmatprep.subr.mxu0 0.0
        %1280 = vmatpush1.msra.mxu0 0.0
        %1281 = vmatprep.subr.mxu0 0.0
        %1282 = vmatpush1.msra.mxu0 0.0
        %1283 = vmatprep.subr.mxu0 0.0
        %1284 = vmatpush1.msra.mxu0 0.0
        %1285 = vmatprep.subr.mxu0 0.0
        %1286 = vmatpush1.msra.mxu0 0.0
        %1287 = vmatprep.subr.mxu0 0.0
        %1288 = vmatpush1.msra.mxu0 0.0
        %1289 = vmatprep.subr.mxu0 0.0
        %1290 = vmatpush1.msra.mxu0 0.0
        %1291 = vmatprep.subr.mxu0 0.0
        %1292 = vmatpush1.msra.mxu0 0.0
        %1293 = vmatprep.subr.mxu0 0.0
        %1294 = vmatpush1.msra.mxu0 0.0
        %1295 = vmatprep.subr.mxu0 0.0
        %1296 = vmatpush1.msra.mxu0 0.0
        %1297 = vmatprep.subr.mxu0 0.0
        %1298 = vmatpush1.msra.mxu0 0.0
        %1299 = vmatprep.subr.mxu0 0.0
        %1300 = vmatpush1.msra.mxu0 0.0
        %1301 = vmatprep.subr.mxu0 0.0
        %1302 = vmatpush1.msra.mxu0 0.0
        %1303 = vmatprep.subr.mxu0 0.0
        %1304 = vmatpush1.msra.mxu0 0.0
        %1305 = vmatprep.subr.mxu0 0.0
        %1306 = vmatpush1.msra.mxu0 0.0
        %1307 = vmatprep.subr.mxu0 0.0
        %1308 = vmatpush1.msra.mxu0 0.0
        %1309 = vmatprep.subr.mxu0 0.0
        %1310 = vmatpush1.msra.mxu0 0.0
        %1311 = vmatprep.subr.mxu0 0.0
        %1312 = vmatpush1.msra.mxu0 0.0
        %1313 = vmatprep.subr.mxu0 0.0
        %1314 = vmatpush1.msra.mxu0 0.0
        %1315 = vmatprep.subr.mxu0 0.0
        %1316 = vmatpush1.msra.mxu0 0.0
        %1317 = vmatprep.subr.mxu0 0.0
        %1318 = vmatpush1.msra.mxu0 0.0
        %1319 = vmatprep.mubr.f32.mxu0 0.0
        %v1320 = vand.u32 %v1068, 4294901760
        %1321 = vmatmul.mubr.f32.gmra.mrb[0].mxu0 %v1320
        %v1322 = vpop.f32.mrb[0].mxu0
        %v1323 = vadd.f32 %v1160, %v1322
        %v1324 = vpop.f32.mrb[0].mxu0
        %v1325 = vadd.f32 %v1162, %v1324
        %1326 = vmatprep.mubr.f32.mxu0 0.0
        %v1327 = vand.u32 %v1070, 4294901760
        %1328 = vmatmul.mubr.f32.gmra.mrb[0].mxu0 %v1327
        %v1329 = vpop.f32.mrb[0].mxu0
        %v1330 = vadd.f32 %v1171, %v1329
        %v1331 = vpop.f32.mrb[0].mxu0
        %v1332 = vadd.f32 %v1173, %v1331
        %1333 = vdwg.mxu0
        %v1334 = vand.u32 %v326, 4294901760
        %v1335 = vsub.f32 %v326, %v1334
        %1336 = vmatprep.subr.mxu0 %v1335
        %v1337 = vand.u32 %v325, 4294901760
        %v1338 = vsub.f32 %v325, %v1337
        %1339 = vmatpush1.msra.mxu0 %v1338
        %v1340 = vand.u32 %v328, 4294901760
        %v1341 = vsub.f32 %v328, %v1340
        %1342 = vmatprep.subr.mxu0 %v1341
        %v1343 = vand.u32 %v327, 4294901760
        %v1344 = vsub.f32 %v327, %v1343
        %1345 = vmatpush1.msra.mxu0 %v1344
        %v1346 = vand.u32 %v330, 4294901760
        %v1347 = vsub.f32 %v330, %v1346
        %1348 = vmatprep.subr.mxu0 %v1347
        %v1349 = vand.u32 %v329, 4294901760
        %v1350 = vsub.f32 %v329, %v1349
        %1351 = vmatpush1.msra.mxu0 %v1350
        %v1352 = vand.u32 %v332, 4294901760
        %v1353 = vsub.f32 %v332, %v1352
        %1354 = vmatprep.subr.mxu0 %v1353
        %v1355 = vand.u32 %v331, 4294901760
        %v1356 = vsub.f32 %v331, %v1355
        %1357 = vmatpush1.msra.mxu0 %v1356
        %v1358 = vand.u32 %v334, 4294901760
        %v1359 = vsub.f32 %v334, %v1358
        %1360 = vmatprep.subr.mxu0 %v1359
        %v1361 = vand.u32 %v333, 4294901760
        %v1362 = vsub.f32 %v333, %v1361
        %1363 = vmatpush1.msra.mxu0 %v1362
        %v1364 = vand.u32 %v336, 4294901760
        %v1365 = vsub.f32 %v336, %v1364
        %1366 = vmatprep.subr.mxu0 %v1365
        %v1367 = vand.u32 %v335, 4294901760
        %v1368 = vsub.f32 %v335, %v1367
        %1369 = vmatpush1.msra.mxu0 %v1368
        %v1370 = vand.u32 %v338, 4294901760
        %v1371 = vsub.f32 %v338, %v1370
        %1372 = vmatprep.subr.mxu0 %v1371
        %v1373 = vand.u32 %v337, 4294901760
        %v1374 = vsub.f32 %v337, %v1373
        %1375 = vmatpush1.msra.mxu0 %v1374
        %v1376 = vand.u32 %v340, 4294901760
        %v1377 = vsub.f32 %v340, %v1376
        %1378 = vmatprep.subr.mxu0 %v1377
        %v1379 = vand.u32 %v339, 4294901760
        %v1380 = vsub.f32 %v339, %v1379
        %1381 = vmatpush1.msra.mxu0 %v1380
        %1382 = vmatprep.subr.mxu0 0.0
        %1383 = vmatpush1.msra.mxu0 0.0
        %1384 = vmatprep.subr.mxu0 0.0
        %1385 = vmatpush1.msra.mxu0 0.0
        %1386 = vmatprep.subr.mxu0 0.0
        %1387 = vmatpush1.msra.mxu0 0.0
        %1388 = vmatprep.subr.mxu0 0.0
        %1389 = vmatpush1.msra.mxu0 0.0
        %1390 = vmatprep.subr.mxu0 0.0
        %1391 = vmatpush1.msra.mxu0 0.0
        %1392 = vmatprep.subr.mxu0 0.0
        %1393 = vmatpush1.msra.mxu0 0.0
        %1394 = vmatprep.subr.mxu0 0.0
        %1395 = vmatpush1.msra.mxu0 0.0
        %1396 = vmatprep.subr.mxu0 0.0
        %1397 = vmatpush1.msra.mxu0 0.0
        %1398 = vmatprep.subr.mxu0 0.0
        %1399 = vmatpush1.msra.mxu0 0.0
        %1400 = vmatprep.subr.mxu0 0.0
        %1401 = vmatpush1.msra.mxu0 0.0
        %1402 = vmatprep.subr.mxu0 0.0
        %1403 = vmatpush1.msra.mxu0 0.0
        %1404 = vmatprep.subr.mxu0 0.0
        %1405 = vmatpush1.msra.mxu0 0.0
        %1406 = vmatprep.subr.mxu0 0.0
        %1407 = vmatpush1.msra.mxu0 0.0
        %1408 = vmatprep.subr.mxu0 0.0
        %1409 = vmatpush1.msra.mxu0 0.0
        %1410 = vmatprep.subr.mxu0 0.0
        %1411 = vmatpush1.msra.mxu0 0.0
        %1412 = vmatprep.subr.mxu0 0.0
        %1413 = vmatpush1.msra.mxu0 0.0
        %1414 = vmatprep.subr.mxu0 0.0
        %1415 = vmatpush1.msra.mxu0 0.0
        %1416 = vmatprep.subr.mxu0 0.0
        %1417 = vmatpush1.msra.mxu0 0.0
        %1418 = vmatprep.subr.mxu0 0.0
        %1419 = vmatpush1.msra.mxu0 0.0
        %1420 = vmatprep.subr.mxu0 0.0
        %1421 = vmatpush1.msra.mxu0 0.0
        %1422 = vmatprep.subr.mxu0 0.0
        %1423 = vmatpush1.msra.mxu0 0.0
        %1424 = vmatprep.subr.mxu0 0.0
        %1425 = vmatpush1.msra.mxu0 0.0
        %1426 = vmatprep.subr.mxu0 0.0
        %1427 = vmatpush1.msra.mxu0 0.0
        %1428 = vmatprep.subr.mxu0 0.0
        %1429 = vmatpush1.msra.mxu0 0.0
        %1430 = vmatprep.mubr.f32.mxu0 0.0
        %v1431 = vand.u32 %v1068, 4294901760
        %v1432 = vsub.f32 %v1068, %v1431
        %1433 = vmatmul.mubr.f32.gmra.mrb[0].mxu0 %v1432
        %v1434 = vpop.f32.mrb[0].mxu0
        %v1435 = vadd.f32 %v1323, %v1434
        %v1436 = vpop.f32.mrb[0].mxu0
        %v1437 = vadd.f32 %v1325, %v1436
        %1438 = vmatprep.mubr.f32.mxu0 0.0
        %v1439 = vand.u32 %v1070, 4294901760
        %v1440 = vsub.f32 %v1070, %v1439
        %1441 = vmatmul.mubr.f32.gmra.mrb[0].mxu0 %v1440
        %v1442 = vpop.f32.mrb[0].mxu0
        %v1443 = vadd.f32 %v1330, %v1442
        %v1444 = vpop.f32.mrb[0].mxu0
        %v1445 = vadd.f32 %v1332, %v1444
        %1446 = vdwg.mxu0
        %v1447 = vand.u32 %v326, 4294901760
        %1448 = vmatprep.subr.mxu0 %v1447
        %v1449 = vand.u32 %v325, 4294901760
        %1450 = vmatpush1.msra.mxu0 %v1449
        %v1451 = vand.u32 %v328, 4294901760
        %1452 = vmatprep.subr.mxu0 %v1451
        %v1453 = vand.u32 %v327, 4294901760
        %1454 = vmatpush1.msra.mxu0 %v1453
        %v1455 = vand.u32 %v330, 4294901760
        %1456 = vmatprep.subr.mxu0 %v1455
        %v1457 = vand.u32 %v329, 4294901760
        %1458 = vmatpush1.msra.mxu0 %v1457
        %v1459 = vand.u32 %v332, 4294901760
        %1460 = vmatprep.subr.mxu0 %v1459
        %v1461 = vand.u32 %v331, 4294901760
        %1462 = vmatpush1.msra.mxu0 %v1461
        %v1463 = vand.u32 %v334, 4294901760
        %1464 = vmatprep.subr.mxu0 %v1463
        %v1465 = vand.u32 %v333, 4294901760
        %1466 = vmatpush1.msra.mxu0 %v1465
        %v1467 = vand.u32 %v336, 4294901760
        %1468 = vmatprep.subr.mxu0 %v1467
        %v1469 = vand.u32 %v335, 4294901760
        %1470 = vmatpush1.msra.mxu0 %v1469
        %v1471 = vand.u32 %v338, 4294901760
        %1472 = vmatprep.subr.mxu0 %v1471
        %v1473 = vand.u32 %v337, 4294901760
        %1474 = vmatpush1.msra.mxu0 %v1473
        %v1475 = vand.u32 %v340, 4294901760
        %1476 = vmatprep.subr.mxu0 %v1475
        %v1477 = vand.u32 %v339, 4294901760
        %1478 = vmatpush1.msra.mxu0 %v1477
        %1479 = vmatprep.subr.mxu0 0.0
        %1480 = vmatpush1.msra.mxu0 0.0
        %1481 = vmatprep.subr.mxu0 0.0
        %1482 = vmatpush1.msra.mxu0 0.0
        %1483 = vmatprep.subr.mxu0 0.0
        %1484 = vmatpush1.msra.mxu0 0.0
        %1485 = vmatprep.subr.mxu0 0.0
        %1486 = vmatpush1.msra.mxu0 0.0
        %1487 = vmatprep.subr.mxu0 0.0
        %1488 = vmatpush1.msra.mxu0 0.0
        %1489 = vmatprep.subr.mxu0 0.0
        %1490 = vmatpush1.msra.mxu0 0.0
        %1491 = vmatprep.subr.mxu0 0.0
        %1492 = vmatpush1.msra.mxu0 0.0
        %1493 = vmatprep.subr.mxu0 0.0
        %1494 = vmatpush1.msra.mxu0 0.0
        %1495 = vmatprep.subr.mxu0 0.0
        %1496 = vmatpush1.msra.mxu0 0.0
        %1497 = vmatprep.subr.mxu0 0.0
        %1498 = vmatpush1.msra.mxu0 0.0
        %1499 = vmatprep.subr.mxu0 0.0
        %1500 = vmatpush1.msra.mxu0 0.0
        %1501 = vmatprep.subr.mxu0 0.0
        %1502 = vmatpush1.msra.mxu0 0.0
        %1503 = vmatprep.subr.mxu0 0.0
        %1504 = vmatpush1.msra.mxu0 0.0
        %1505 = vmatprep.subr.mxu0 0.0
        %1506 = vmatpush1.msra.mxu0 0.0
        %1507 = vmatprep.subr.mxu0 0.0
        %1508 = vmatpush1.msra.mxu0 0.0
        %1509 = vmatprep.subr.mxu0 0.0
        %1510 = vmatpush1.msra.mxu0 0.0
        %1511 = vmatprep.subr.mxu0 0.0
        %1512 = vmatpush1.msra.mxu0 0.0
        %1513 = vmatprep.subr.mxu0 0.0
        %1514 = vmatpush1.msra.mxu0 0.0
        %1515 = vmatprep.subr.mxu0 0.0
        %1516 = vmatpush1.msra.mxu0 0.0
        %1517 = vmatprep.subr.mxu0 0.0
        %1518 = vmatpush1.msra.mxu0 0.0
        %1519 = vmatprep.subr.mxu0 0.0
        %1520 = vmatpush1.msra.mxu0 0.0
        %1521 = vmatprep.subr.mxu0 0.0
        %1522 = vmatpush1.msra.mxu0 0.0
        %1523 = vmatprep.subr.mxu0 0.0
        %1524 = vmatpush1.msra.mxu0 0.0
        %1525 = vmatprep.subr.mxu0 0.0
        %1526 = vmatpush1.msra.mxu0 0.0
        %1527 = vmatprep.mubr.f32.mxu0 0.0
        %v1528 = vand.u32 %v1068, 4294901760
        %v1529 = vsub.f32 %v1068, %v1528
        %v1530 = vand.u32 %v1529, 4294901760
        %1531 = vmatmul.mubr.f32.gmra.mrb[0].mxu0 %v1530
        %v1532 = vpop.f32.mrb[0].mxu0
        %v1533 = vadd.f32 %v1435, %v1532
        %v1534 = vpop.f32.mrb[0].mxu0
        %v1535 = vadd.f32 %v1437, %v1534
        %1536 = vmatprep.mubr.f32.mxu0 0.0
        %v1537 = vand.u32 %v1070, 4294901760
        %v1538 = vsub.f32 %v1070, %v1537
        %v1539 = vand.u32 %v1538, 4294901760
        %1540 = vmatmul.mubr.f32.gmra.mrb[0].mxu0 %v1539
        %v1541 = vpop.f32.mrb[0].mxu0
        %v1542 = vadd.f32 %v1443, %v1541
        %v1543 = vpop.f32.mrb[0].mxu0
        %v1544 = vadd.f32 %v1445, %v1543
        %1545 = vdwg.mxu0
        %v1546 = vand.u32 %v326, 4294901760
        %v1547 = vsub.f32 %v326, %v1546
        %v1548 = vand.u32 %v1547, 4294901760
        %1549 = vmatprep.subr.mxu0 %v1548
        %v1550 = vand.u32 %v325, 4294901760
        %v1551 = vsub.f32 %v325, %v1550
        %v1552 = vand.u32 %v1551, 4294901760
        %1553 = vmatpush1.msra.mxu0 %v1552
        %v1554 = vand.u32 %v328, 4294901760
        %v1555 = vsub.f32 %v328, %v1554
        %v1556 = vand.u32 %v1555, 4294901760
        %1557 = vmatprep.subr.mxu0 %v1556
        %v1558 = vand.u32 %v327, 4294901760
        %v1559 = vsub.f32 %v327, %v1558
        %v1560 = vand.u32 %v1559, 4294901760
        %1561 = vmatpush1.msra.mxu0 %v1560
        %v1562 = vand.u32 %v330, 4294901760
        %v1563 = vsub.f32 %v330, %v1562
        %v1564 = vand.u32 %v1563, 4294901760
        %1565 = vmatprep.subr.mxu0 %v1564
        %v1566 = vand.u32 %v329, 4294901760
        %v1567 = vsub.f32 %v329, %v1566
        %v1568 = vand.u32 %v1567, 4294901760
        %1569 = vmatpush1.msra.mxu0 %v1568
        %v1570 = vand.u32 %v332, 4294901760
        %v1571 = vsub.f32 %v332, %v1570
        %v1572 = vand.u32 %v1571, 4294901760
        %1573 = vmatprep.subr.mxu0 %v1572
        %v1574 = vand.u32 %v331, 4294901760
        %v1575 = vsub.f32 %v331, %v1574
        %v1576 = vand.u32 %v1575, 4294901760
        %1577 = vmatpush1.msra.mxu0 %v1576
        %v1578 = vand.u32 %v334, 4294901760
        %v1579 = vsub.f32 %v334, %v1578
        %v1580 = vand.u32 %v1579, 4294901760
        %1581 = vmatprep.subr.mxu0 %v1580
        %v1582 = vand.u32 %v333, 4294901760
        %v1583 = vsub.f32 %v333, %v1582
        %v1584 = vand.u32 %v1583, 4294901760
        %1585 = vmatpush1.msra.mxu0 %v1584
        %v1586 = vand.u32 %v336, 4294901760
        %v1587 = vsub.f32 %v336, %v1586
        %v1588 = vand.u32 %v1587, 4294901760
        %1589 = vmatprep.subr.mxu0 %v1588
        %v1590 = vand.u32 %v335, 4294901760
        %v1591 = vsub.f32 %v335, %v1590
        %v1592 = vand.u32 %v1591, 4294901760
        %1593 = vmatpush1.msra.mxu0 %v1592
        %v1594 = vand.u32 %v338, 4294901760
        %v1595 = vsub.f32 %v338, %v1594
        %v1596 = vand.u32 %v1595, 4294901760
        %1597 = vmatprep.subr.mxu0 %v1596
        %v1598 = vand.u32 %v337, 4294901760
        %v1599 = vsub.f32 %v337, %v1598
        %v1600 = vand.u32 %v1599, 4294901760
        %1601 = vmatpush1.msra.mxu0 %v1600
        %v1602 = vand.u32 %v340, 4294901760
        %v1603 = vsub.f32 %v340, %v1602
        %v1604 = vand.u32 %v1603, 4294901760
        %1605 = vmatprep.subr.mxu0 %v1604
        %v1606 = vand.u32 %v339, 4294901760
        %v1607 = vsub.f32 %v339, %v1606
        %v1608 = vand.u32 %v1607, 4294901760
        %1609 = vmatpush1.msra.mxu0 %v1608
        %1610 = vmatprep.subr.mxu0 0.0
        %1611 = vmatpush1.msra.mxu0 0.0
        %1612 = vmatprep.subr.mxu0 0.0
        %1613 = vmatpush1.msra.mxu0 0.0
        %1614 = vmatprep.subr.mxu0 0.0
        %1615 = vmatpush1.msra.mxu0 0.0
        %1616 = vmatprep.subr.mxu0 0.0
        %1617 = vmatpush1.msra.mxu0 0.0
        %1618 = vmatprep.subr.mxu0 0.0
        %1619 = vmatpush1.msra.mxu0 0.0
        %1620 = vmatprep.subr.mxu0 0.0
        %1621 = vmatpush1.msra.mxu0 0.0
        %1622 = vmatprep.subr.mxu0 0.0
        %1623 = vmatpush1.msra.mxu0 0.0
        %1624 = vmatprep.subr.mxu0 0.0
        %1625 = vmatpush1.msra.mxu0 0.0
        %1626 = vmatprep.subr.mxu0 0.0
        %1627 = vmatpush1.msra.mxu0 0.0
        %1628 = vmatprep.subr.mxu0 0.0
        %1629 = vmatpush1.msra.mxu0 0.0
        %1630 = vmatprep.subr.mxu0 0.0
        %1631 = vmatpush1.msra.mxu0 0.0
        %1632 = vmatprep.subr.mxu0 0.0
        %1633 = vmatpush1.msra.mxu0 0.0
        %1634 = vmatprep.subr.mxu0 0.0
        %1635 = vmatpush1.msra.mxu0 0.0
        %1636 = vmatprep.subr.mxu0 0.0
        %1637 = vmatpush1.msra.mxu0 0.0
        %1638 = vmatprep.subr.mxu0 0.0
        %1639 = vmatpush1.msra.mxu0 0.0
        %1640 = vmatprep.subr.mxu0 0.0
        %1641 = vmatpush1.msra.mxu0 0.0
        %1642 = vmatprep.subr.mxu0 0.0
        %1643 = vmatpush1.msra.mxu0 0.0
        %1644 = vmatprep.subr.mxu0 0.0
        %1645 = vmatpush1.msra.mxu0 0.0
        %1646 = vmatprep.subr.mxu0 0.0
        %1647 = vmatpush1.msra.mxu0 0.0
        %1648 = vmatprep.subr.mxu0 0.0
        %1649 = vmatpush1.msra.mxu0 0.0
        %1650 = vmatprep.subr.mxu0 0.0
        %1651 = vmatpush1.msra.mxu0 0.0
        %1652 = vmatprep.subr.mxu0 0.0
        %1653 = vmatpush1.msra.mxu0 0.0
        %1654 = vmatprep.subr.mxu0 0.0
        %1655 = vmatpush1.msra.mxu0 0.0
        %1656 = vmatprep.subr.mxu0 0.0
        %1657 = vmatpush1.msra.mxu0 0.0
        %1658 = vmatprep.mubr.f32.mxu0 0.0
        %v1659 = vand.u32 %v1068, 4294901760
        %1660 = vmatmul.mubr.f32.gmra.mrb[0].mxu0 %v1659
        %v1661 = vpop.f32.mrb[0].mxu0
        %v1662 = vadd.f32 %v1533, %v1661
        %v1663 = vpop.f32.mrb[0].mxu0
        %v1664 = vadd.f32 %v1535, %v1663
        %1665 = vmatprep.mubr.f32.mxu0 0.0
        %v1666 = vand.u32 %v1070, 4294901760
        %1667 = vmatmul.mubr.f32.gmra.mrb[0].mxu0 %v1666
        %v1668 = vpop.f32.mrb[0].mxu0
        %v1669 = vadd.f32 %v1542, %v1668
        %v1670 = vpop.f32.mrb[0].mxu0
        %v1671 = vadd.f32 %v1544, %v1670
        %1672 = vdwg.mxu0
        %v1673 = vand.u32 %v326, 4294901760
        %1674 = vmatprep.subr.mxu0 %v1673
        %v1675 = vand.u32 %v325, 4294901760
        %1676 = vmatpush1.msra.mxu0 %v1675
        %v1677 = vand.u32 %v328, 4294901760
        %1678 = vmatprep.subr.mxu0 %v1677
        %v1679 = vand.u32 %v327, 4294901760
        %1680 = vmatpush1.msra.mxu0 %v1679
        %v1681 = vand.u32 %v330, 4294901760
        %1682 = vmatprep.subr.mxu0 %v1681
        %v1683 = vand.u32 %v329, 4294901760
        %1684 = vmatpush1.msra.mxu0 %v1683
        %v1685 = vand.u32 %v332, 4294901760
        %1686 = vmatprep.subr.mxu0 %v1685
        %v1687 = vand.u32 %v331, 4294901760
        %1688 = vmatpush1.msra.mxu0 %v1687
        %v1689 = vand.u32 %v334, 4294901760
        %1690 = vmatprep.subr.mxu0 %v1689
        %v1691 = vand.u32 %v333, 4294901760
        %1692 = vmatpush1.msra.mxu0 %v1691
        %v1693 = vand.u32 %v336, 4294901760
        %1694 = vmatprep.subr.mxu0 %v1693
        %v1695 = vand.u32 %v335, 4294901760
        %1696 = vmatpush1.msra.mxu0 %v1695
        %v1697 = vand.u32 %v338, 4294901760
        %1698 = vmatprep.subr.mxu0 %v1697
        %v1699 = vand.u32 %v337, 4294901760
        %1700 = vmatpush1.msra.mxu0 %v1699
        %v1701 = vand.u32 %v340, 4294901760
        %1702 = vmatprep.subr.mxu0 %v1701
        %v1703 = vand.u32 %v339, 4294901760
        %1704 = vmatpush1.msra.mxu0 %v1703
        %1705 = vmatprep.subr.mxu0 0.0
        %1706 = vmatpush1.msra.mxu0 0.0
        %1707 = vmatprep.subr.mxu0 0.0
        %1708 = vmatpush1.msra.mxu0 0.0
        %1709 = vmatprep.subr.mxu0 0.0
        %1710 = vmatpush1.msra.mxu0 0.0
        %1711 = vmatprep.subr.mxu0 0.0
        %1712 = vmatpush1.msra.mxu0 0.0
        %1713 = vmatprep.subr.mxu0 0.0
        %1714 = vmatpush1.msra.mxu0 0.0
        %1715 = vmatprep.subr.mxu0 0.0
        %1716 = vmatpush1.msra.mxu0 0.0
        %1717 = vmatprep.subr.mxu0 0.0
        %1718 = vmatpush1.msra.mxu0 0.0
        %1719 = vmatprep.subr.mxu0 0.0
        %1720 = vmatpush1.msra.mxu0 0.0
        %1721 = vmatprep.subr.mxu0 0.0
        %1722 = vmatpush1.msra.mxu0 0.0
        %1723 = vmatprep.subr.mxu0 0.0
        %1724 = vmatpush1.msra.mxu0 0.0
        %1725 = vmatprep.subr.mxu0 0.0
        %1726 = vmatpush1.msra.mxu0 0.0
        %1727 = vmatprep.subr.mxu0 0.0
        %1728 = vmatpush1.msra.mxu0 0.0
        %1729 = vmatprep.subr.mxu0 0.0
        %1730 = vmatpush1.msra.mxu0 0.0
        %1731 = vmatprep.subr.mxu0 0.0
        %1732 = vmatpush1.msra.mxu0 0.0
        %1733 = vmatprep.subr.mxu0 0.0
        %1734 = vmatpush1.msra.mxu0 0.0
        %1735 = vmatprep.subr.mxu0 0.0
        %1736 = vmatpush1.msra.mxu0 0.0
        %1737 = vmatprep.subr.mxu0 0.0
        %1738 = vmatpush1.msra.mxu0 0.0
        %1739 = vmatprep.subr.mxu0 0.0
        %1740 = vmatpush1.msra.mxu0 0.0
        %1741 = vmatprep.subr.mxu0 0.0
        %1742 = vmatpush1.msra.mxu0 0.0
        %1743 = vmatprep.subr.mxu0 0.0
        %1744 = vmatpush1.msra.mxu0 0.0
        %1745 = vmatprep.subr.mxu0 0.0
        %1746 = vmatpush1.msra.mxu0 0.0
        %1747 = vmatprep.subr.mxu0 0.0
        %1748 = vmatpush1.msra.mxu0 0.0
        %1749 = vmatprep.subr.mxu0 0.0
        %1750 = vmatpush1.msra.mxu0 0.0
        %1751 = vmatprep.subr.mxu0 0.0
        %1752 = vmatpush1.msra.mxu0 0.0
        %1753 = vmatprep.mubr.f32.mxu0 0.0
        %v1754 = vand.u32 %v1068, 4294901760
        %1755 = vmatmul.mubr.f32.gmra.mrb[0].mxu0 %v1754
        %v1756 = vpop.f32.mrb[0].mxu0
        %v1757 = vadd.f32 %v1662, %v1756
        %v1758 = vpop.f32.mrb[0].mxu0
        %v1759 = vadd.f32 %v1664, %v1758
        %1760 = vmatprep.mubr.f32.mxu0 0.0
        %v1761 = vand.u32 %v1070, 4294901760
        %1762 = vmatmul.mubr.f32.gmra.mrb[0].mxu0 %v1761
        %v1763 = vpop.f32.mrb[0].mxu0
        %v1764 = vadd.f32 %v1669, %v1763
        %v1765 = vpop.f32.mrb[0].mxu0
        %v1766 = vadd.f32 %v1671, %v1765
        %1767 = vdwg.mxu0
        %s1768 = scalar_lea.vmem [#allocation5], 256
        %v1769 = vld [vmem:[%s1768] sm:$0xff]
        %v1770 = vld [vmem:[%s1768 + $0x8] sm:$0xff]
        %v1771 = vld [vmem:[%s1768 + $0x10] sm:$0xff]
        %v1772 = vld [vmem:[%s1768 + $0x18] sm:$0xff]
        %v1773 = vld [vmem:[%s1768 + $0x20] sm:$0xff]
        %v1774 = vld [vmem:[%s1768 + $0x28] sm:$0xff]
        %v1775 = vld [vmem:[%s1768 + $0x30] sm:$0xff]
        %v1776 = vld [vmem:[%s1768 + $0x38] sm:$0xff]
        %v1777 = vld [vmem:[%s1768 + $0x40] sm:$0xff]
        %v1778 = vld [vmem:[%s1768 + $0x48] sm:$0xff]
        %v1779 = vld [vmem:[%s1768 + $0x50] sm:$0xff]
        %v1780 = vld [vmem:[%s1768 + $0x58] sm:$0xff]
        %v1781 = vld [vmem:[%s1768 + $0x60] sm:$0xff]
        %v1782 = vld [vmem:[%s1768 + $0x68] sm:$0xff]
        %v1783 = vld [vmem:[%s1768 + $0x70] sm:$0xff]
        %v1784 = vld [vmem:[%s1768 + $0x78] sm:$0xff]
        %vm1785 = vcmask 1045504
        %v1786 = vrot.slane %v322, 2
        %v1787 = vrot.slane %v323, 2
        %v1788 = vsel %vm1785, %v1786, %v1787
        %v1789 = vrot.slane %v324, 2
        %v1790 = vsel %vm1785, %v1787, %v1789
        %v1791 = vsel %vm367, %v1788, 0
        %v1793 = vsel %vm367, %v1790, 0
        %v1795 = vand.u32 %v1770, 4294901760
        %1796 = vmatprep.subr.mxu0 %v1795
        %v1797 = vand.u32 %v1769, 4294901760
        %1798 = vmatpush1.msra.mxu0 %v1797
        %v1799 = vand.u32 %v1772, 4294901760
        %1800 = vmatprep.subr.mxu0 %v1799
        %v1801 = vand.u32 %v1771, 4294901760
        %1802 = vmatpush1.msra.mxu0 %v1801
        %v1803 = vand.u32 %v1774, 4294901760
        %1804 = vmatprep.subr.mxu0 %v1803
        %v1805 = vand.u32 %v1773, 4294901760
        %1806 = vmatpush1.msra.mxu0 %v1805
        %v1807 = vand.u32 %v1776, 4294901760
        %1808 = vmatprep.subr.mxu0 %v1807
        %v1809 = vand.u32 %v1775, 4294901760
        %1810 = vmatpush1.msra.mxu0 %v1809
        %v1811 = vand.u32 %v1778, 4294901760
        %1812 = vmatprep.subr.mxu0 %v1811
        %v1813 = vand.u32 %v1777, 4294901760
        %1814 = vmatpush1.msra.mxu0 %v1813
        %v1815 = vand.u32 %v1780, 4294901760
        %1816 = vmatprep.subr.mxu0 %v1815
        %v1817 = vand.u32 %v1779, 4294901760
        %1818 = vmatpush1.msra.mxu0 %v1817
        %v1819 = vand.u32 %v1782, 4294901760
        %1820 = vmatprep.subr.mxu0 %v1819
        %v1821 = vand.u32 %v1781, 4294901760
        %1822 = vmatpush1.msra.mxu0 %v1821
        %v1823 = vand.u32 %v1784, 4294901760
        %1824 = vmatprep.subr.mxu0 %v1823
        %v1825 = vand.u32 %v1783, 4294901760
        %1826 = vmatpush1.msra.mxu0 %v1825
        %1827 = vmatprep.subr.mxu0 0.0
        %1828 = vmatpush1.msra.mxu0 0.0
        %1829 = vmatprep.subr.mxu0 0.0
        %1830 = vmatpush1.msra.mxu0 0.0
        %1831 = vmatprep.subr.mxu0 0.0
        %1832 = vmatpush1.msra.mxu0 0.0
        %1833 = vmatprep.subr.mxu0 0.0
        %1834 = vmatpush1.msra.mxu0 0.0
        %1835 = vmatprep.subr.mxu0 0.0
        %1836 = vmatpush1.msra.mxu0 0.0
        %1837 = vmatprep.subr.mxu0 0.0
        %1838 = vmatpush1.msra.mxu0 0.0
        %1839 = vmatprep.subr.mxu0 0.0
        %1840 = vmatpush1.msra.mxu0 0.0
        %1841 = vmatprep.subr.mxu0 0.0
        %1842 = vmatpush1.msra.mxu0 0.0
        %1843 = vmatprep.subr.mxu0 0.0
        %1844 = vmatpush1.msra.mxu0 0.0
        %1845 = vmatprep.subr.mxu0 0.0
        %1846 = vmatpush1.msra.mxu0 0.0
        %1847 = vmatprep.subr.mxu0 0.0
        %1848 = vmatpush1.msra.mxu0 0.0
        %1849 = vmatprep.subr.mxu0 0.0
        %1850 = vmatpush1.msra.mxu0 0.0
        %1851 = vmatprep.subr.mxu0 0.0
        %1852 = vmatpush1.msra.mxu0 0.0
        %1853 = vmatprep.subr.mxu0 0.0
        %1854 = vmatpush1.msra.mxu0 0.0
        %1855 = vmatprep.subr.mxu0 0.0
        %1856 = vmatpush1.msra.mxu0 0.0
        %1857 = vmatprep.subr.mxu0 0.0
        %1858 = vmatpush1.msra.mxu0 0.0
        %1859 = vmatprep.subr.mxu0 0.0
        %1860 = vmatpush1.msra.mxu0 0.0
        %1861 = vmatprep.subr.mxu0 0.0
        %1862 = vmatpush1.msra.mxu0 0.0
        %1863 = vmatprep.subr.mxu0 0.0
        %1864 = vmatpush1.msra.mxu0 0.0
        %1865 = vmatprep.subr.mxu0 0.0
        %1866 = vmatpush1.msra.mxu0 0.0
        %1867 = vmatprep.subr.mxu0 0.0
        %1868 = vmatpush1.msra.mxu0 0.0
        %1869 = vmatprep.subr.mxu0 0.0
        %1870 = vmatpush1.msra.mxu0 0.0
        %1871 = vmatprep.subr.mxu0 0.0
        %1872 = vmatpush1.msra.mxu0 0.0
        %1873 = vmatprep.subr.mxu0 0.0
        %1874 = vmatpush1.msra.mxu0 0.0
        %1875 = vmatprep.mubr.f32.mxu0 0.0
        %v1876 = vand.u32 %v1791, 4294901760
        %v1877 = vsub.f32 %v1791, %v1876
        %v1878 = vand.u32 %v1877, 4294901760
        %v1879 = vsub.f32 %v1877, %v1878
        %v1880 = vand.u32 %v1879, 4294901760
        %1881 = vmatmul.mubr.f32.gmra.mrb[0].mxu0 %v1880
        %v1882 = vpop.f32.mrb[0].mxu0
        %v1883 = vadd.f32 0.0, %v1882
        %v1884 = vpop.f32.mrb[0].mxu0
        %v1885 = vadd.f32 0.0, %v1884
        %1886 = vmatprep.mubr.f32.mxu0 0.0
        %v1887 = vand.u32 %v1793, 4294901760
        %v1888 = vsub.f32 %v1793, %v1887
        %v1889 = vand.u32 %v1888, 4294901760
        %v1890 = vsub.f32 %v1888, %v1889
        %v1891 = vand.u32 %v1890, 4294901760
        %1892 = vmatmul.mubr.f32.gmra.mrb[0].mxu0 %v1891
        %v1893 = vpop.f32.mrb[0].mxu0
        %v1894 = vadd.f32 0.0, %v1893
        %v1895 = vpop.f32.mrb[0].mxu0
        %v1896 = vadd.f32 0.0, %v1895
        %1897 = vdwg.mxu0
        %v1898 = vand.u32 %v1770, 4294901760
        %v1899 = vsub.f32 %v1770, %v1898
        %v1900 = vand.u32 %v1899, 4294901760
        %v1901 = vsub.f32 %v1899, %v1900
        %v1902 = vand.u32 %v1901, 4294901760
        %1903 = vmatprep.subr.mxu0 %v1902
        %v1904 = vand.u32 %v1769, 4294901760
        %v1905 = vsub.f32 %v1769, %v1904
        %v1906 = vand.u32 %v1905, 4294901760
        %v1907 = vsub.f32 %v1905, %v1906
        %v1908 = vand.u32 %v1907, 4294901760
        %1909 = vmatpush1.msra.mxu0 %v1908
        %v1910 = vand.u32 %v1772, 4294901760
        %v1911 = vsub.f32 %v1772, %v1910
        %v1912 = vand.u32 %v1911, 4294901760
        %v1913 = vsub.f32 %v1911, %v1912
        %v1914 = vand.u32 %v1913, 4294901760
        %1915 = vmatprep.subr.mxu0 %v1914
        %v1916 = vand.u32 %v1771, 4294901760
        %v1917 = vsub.f32 %v1771, %v1916
        %v1918 = vand.u32 %v1917, 4294901760
        %v1919 = vsub.f32 %v1917, %v1918
        %v1920 = vand.u32 %v1919, 4294901760
        %1921 = vmatpush1.msra.mxu0 %v1920
        %v1922 = vand.u32 %v1774, 4294901760
        %v1923 = vsub.f32 %v1774, %v1922
        %v1924 = vand.u32 %v1923, 4294901760
        %v1925 = vsub.f32 %v1923, %v1924
        %v1926 = vand.u32 %v1925, 4294901760
        %1927 = vmatprep.subr.mxu0 %v1926
        %v1928 = vand.u32 %v1773, 4294901760
        %v1929 = vsub.f32 %v1773, %v1928
        %v1930 = vand.u32 %v1929, 4294901760
        %v1931 = vsub.f32 %v1929, %v1930
        %v1932 = vand.u32 %v1931, 4294901760
        %1933 = vmatpush1.msra.mxu0 %v1932
        %v1934 = vand.u32 %v1776, 4294901760
        %v1935 = vsub.f32 %v1776, %v1934
        %v1936 = vand.u32 %v1935, 4294901760
        %v1937 = vsub.f32 %v1935, %v1936
        %v1938 = vand.u32 %v1937, 4294901760
        %1939 = vmatprep.subr.mxu0 %v1938
        %v1940 = vand.u32 %v1775, 4294901760
        %v1941 = vsub.f32 %v1775, %v1940
        %v1942 = vand.u32 %v1941, 4294901760
        %v1943 = vsub.f32 %v1941, %v1942
        %v1944 = vand.u32 %v1943, 4294901760
        %1945 = vmatpush1.msra.mxu0 %v1944
        %v1946 = vand.u32 %v1778, 4294901760
        %v1947 = vsub.f32 %v1778, %v1946
        %v1948 = vand.u32 %v1947, 4294901760
        %v1949 = vsub.f32 %v1947, %v1948
        %v1950 = vand.u32 %v1949, 4294901760
        %1951 = vmatprep.subr.mxu0 %v1950
        %v1952 = vand.u32 %v1777, 4294901760
        %v1953 = vsub.f32 %v1777, %v1952
        %v1954 = vand.u32 %v1953, 4294901760
        %v1955 = vsub.f32 %v1953, %v1954
        %v1956 = vand.u32 %v1955, 4294901760
        %1957 = vmatpush1.msra.mxu0 %v1956
        %v1958 = vand.u32 %v1780, 4294901760
        %v1959 = vsub.f32 %v1780, %v1958
        %v1960 = vand.u32 %v1959, 4294901760
        %v1961 = vsub.f32 %v1959, %v1960
        %v1962 = vand.u32 %v1961, 4294901760
        %1963 = vmatprep.subr.mxu0 %v1962
        %v1964 = vand.u32 %v1779, 4294901760
        %v1965 = vsub.f32 %v1779, %v1964
        %v1966 = vand.u32 %v1965, 4294901760
        %v1967 = vsub.f32 %v1965, %v1966
        %v1968 = vand.u32 %v1967, 4294901760
        %1969 = vmatpush1.msra.mxu0 %v1968
        %v1970 = vand.u32 %v1782, 4294901760
        %v1971 = vsub.f32 %v1782, %v1970
        %v1972 = vand.u32 %v1971, 4294901760
        %v1973 = vsub.f32 %v1971, %v1972
        %v1974 = vand.u32 %v1973, 4294901760
        %1975 = vmatprep.subr.mxu0 %v1974
        %v1976 = vand.u32 %v1781, 4294901760
        %v1977 = vsub.f32 %v1781, %v1976
        %v1978 = vand.u32 %v1977, 4294901760
        %v1979 = vsub.f32 %v1977, %v1978
        %v1980 = vand.u32 %v1979, 4294901760
        %1981 = vmatpush1.msra.mxu0 %v1980
        %v1982 = vand.u32 %v1784, 4294901760
        %v1983 = vsub.f32 %v1784, %v1982
        %v1984 = vand.u32 %v1983, 4294901760
        %v1985 = vsub.f32 %v1983, %v1984
        %v1986 = vand.u32 %v1985, 4294901760
        %1987 = vmatprep.subr.mxu0 %v1986
        %v1988 = vand.u32 %v1783, 4294901760
        %v1989 = vsub.f32 %v1783, %v1988
        %v1990 = vand.u32 %v1989, 4294901760
        %v1991 = vsub.f32 %v1989, %v1990
        %v1992 = vand.u32 %v1991, 4294901760
        %1993 = vmatpush1.msra.mxu0 %v1992
        %1994 = vmatprep.subr.mxu0 0.0
        %1995 = vmatpush1.msra.mxu0 0.0
        %1996 = vmatprep.subr.mxu0 0.0
        %1997 = vmatpush1.msra.mxu0 0.0
        %1998 = vmatprep.subr.mxu0 0.0
        %1999 = vmatpush1.msra.mxu0 0.0
        %2000 = vmatprep.subr.mxu0 0.0
        %2001 = vmatpush1.msra.mxu0 0.0
        %2002 = vmatprep.subr.mxu0 0.0
        %2003 = vmatpush1.msra.mxu0 0.0
        %2004 = vmatprep.subr.mxu0 0.0
        %2005 = vmatpush1.msra.mxu0 0.0
        %2006 = vmatprep.subr.mxu0 0.0
        %2007 = vmatpush1.msra.mxu0 0.0
        %2008 = vmatprep.subr.mxu0 0.0
        %2009 = vmatpush1.msra.mxu0 0.0
        %2010 = vmatprep.subr.mxu0 0.0
        %2011 = vmatpush1.msra.mxu0 0.0
        %2012 = vmatprep.subr.mxu0 0.0
        %2013 = vmatpush1.msra.mxu0 0.0
        %2014 = vmatprep.subr.mxu0 0.0
        %2015 = vmatpush1.msra.mxu0 0.0
        %2016 = vmatprep.subr.mxu0 0.0
        %2017 = vmatpush1.msra.mxu0 0.0
        %2018 = vmatprep.subr.mxu0 0.0
        %2019 = vmatpush1.msra.mxu0 0.0
        %2020 = vmatprep.subr.mxu0 0.0
        %2021 = vmatpush1.msra.mxu0 0.0
        %2022 = vmatprep.subr.mxu0 0.0
        %2023 = vmatpush1.msra.mxu0 0.0
        %2024 = vmatprep.subr.mxu0 0.0
        %2025 = vmatpush1.msra.mxu0 0.0
        %2026 = vmatprep.subr.mxu0 0.0
        %2027 = vmatpush1.msra.mxu0 0.0
        %2028 = vmatprep.subr.mxu0 0.0
        %2029 = vmatpush1.msra.mxu0 0.0
        %2030 = vmatprep.subr.mxu0 0.0
        %2031 = vmatpush1.msra.mxu0 0.0
        %2032 = vmatprep.subr.mxu0 0.0
        %2033 = vmatpush1.msra.mxu0 0.0
        %2034 = vmatprep.subr.mxu0 0.0
        %2035 = vmatpush1.msra.mxu0 0.0
        %2036 = vmatprep.subr.mxu0 0.0
        %2037 = vmatpush1.msra.mxu0 0.0
        %2038 = vmatprep.subr.mxu0 0.0
        %2039 = vmatpush1.msra.mxu0 0.0
        %2040 = vmatprep.subr.mxu0 0.0
        %2041 = vmatpush1.msra.mxu0 0.0
        %2042 = vmatprep.mubr.f32.mxu0 0.0
        %v2043 = vand.u32 %v1791, 4294901760
        %2044 = vmatmul.mubr.f32.gmra.mrb[0].mxu0 %v2043
        %v2045 = vpop.f32.mrb[0].mxu0
        %v2046 = vadd.f32 %v1883, %v2045
        %v2047 = vpop.f32.mrb[0].mxu0
        %v2048 = vadd.f32 %v1885, %v2047
        %2049 = vmatprep.mubr.f32.mxu0 0.0
        %v2050 = vand.u32 %v1793, 4294901760
        %2051 = vmatmul.mubr.f32.gmra.mrb[0].mxu0 %v2050
        %v2052 = vpop.f32.mrb[0].mxu0
        %v2053 = vadd.f32 %v1894, %v2052
        %v2054 = vpop.f32.mrb[0].mxu0
        %v2055 = vadd.f32 %v1896, %v2054
        %2056 = vdwg.mxu0
        %v2057 = vand.u32 %v1770, 4294901760
        %v2058 = vsub.f32 %v1770, %v2057
        %2059 = vmatprep.subr.mxu0 %v2058
        %v2060 = vand.u32 %v1769, 4294901760
        %v2061 = vsub.f32 %v1769, %v2060
        %2062 = vmatpush1.msra.mxu0 %v2061
        %v2063 = vand.u32 %v1772, 4294901760
        %v2064 = vsub.f32 %v1772, %v2063
        %2065 = vmatprep.subr.mxu0 %v2064
        %v2066 = vand.u32 %v1771, 4294901760
        %v2067 = vsub.f32 %v1771, %v2066
        %2068 = vmatpush1.msra.mxu0 %v2067
        %v2069 = vand.u32 %v1774, 4294901760
        %v2070 = vsub.f32 %v1774, %v2069
        %2071 = vmatprep.subr.mxu0 %v2070
        %v2072 = vand.u32 %v1773, 4294901760
        %v2073 = vsub.f32 %v1773, %v2072
        %2074 = vmatpush1.msra.mxu0 %v2073
        %v2075 = vand.u32 %v1776, 4294901760
        %v2076 = vsub.f32 %v1776, %v2075
        %2077 = vmatprep.subr.mxu0 %v2076
        %v2078 = vand.u32 %v1775, 4294901760
        %v2079 = vsub.f32 %v1775, %v2078
        %2080 = vmatpush1.msra.mxu0 %v2079
        %v2081 = vand.u32 %v1778, 4294901760
        %v2082 = vsub.f32 %v1778, %v2081
        %2083 = vmatprep.subr.mxu0 %v2082
        %v2084 = vand.u32 %v1777, 4294901760
        %v2085 = vsub.f32 %v1777, %v2084
        %2086 = vmatpush1.msra.mxu0 %v2085
        %v2087 = vand.u32 %v1780, 4294901760
        %v2088 = vsub.f32 %v1780, %v2087
        %2089 = vmatprep.subr.mxu0 %v2088
        %v2090 = vand.u32 %v1779, 4294901760
        %v2091 = vsub.f32 %v1779, %v2090
        %2092 = vmatpush1.msra.mxu0 %v2091
        %v2093 = vand.u32 %v1782, 4294901760
        %v2094 = vsub.f32 %v1782, %v2093
        %2095 = vmatprep.subr.mxu0 %v2094
        %v2096 = vand.u32 %v1781, 4294901760
        %v2097 = vsub.f32 %v1781, %v2096
        %2098 = vmatpush1.msra.mxu0 %v2097
        %v2099 = vand.u32 %v1784, 4294901760
        %v2100 = vsub.f32 %v1784, %v2099
        %2101 = vmatprep.subr.mxu0 %v2100
        %v2102 = vand.u32 %v1783, 4294901760
        %v2103 = vsub.f32 %v1783, %v2102
        %2104 = vmatpush1.msra.mxu0 %v2103
        %2105 = vmatprep.subr.mxu0 0.0
        %2106 = vmatpush1.msra.mxu0 0.0
        %2107 = vmatprep.subr.mxu0 0.0
        %2108 = vmatpush1.msra.mxu0 0.0
        %2109 = vmatprep.subr.mxu0 0.0
        %2110 = vmatpush1.msra.mxu0 0.0
        %2111 = vmatprep.subr.mxu0 0.0
        %2112 = vmatpush1.msra.mxu0 0.0
        %2113 = vmatprep.subr.mxu0 0.0
        %2114 = vmatpush1.msra.mxu0 0.0
        %2115 = vmatprep.subr.mxu0 0.0
        %2116 = vmatpush1.msra.mxu0 0.0
        %2117 = vmatprep.subr.mxu0 0.0
        %2118 = vmatpush1.msra.mxu0 0.0
        %2119 = vmatprep.subr.mxu0 0.0
        %2120 = vmatpush1.msra.mxu0 0.0
        %2121 = vmatprep.subr.mxu0 0.0
        %2122 = vmatpush1.msra.mxu0 0.0
        %2123 = vmatprep.subr.mxu0 0.0
        %2124 = vmatpush1.msra.mxu0 0.0
        %2125 = vmatprep.subr.mxu0 0.0
        %2126 = vmatpush1.msra.mxu0 0.0
        %2127 = vmatprep.subr.mxu0 0.0
        %2128 = vmatpush1.msra.mxu0 0.0
        %2129 = vmatprep.subr.mxu0 0.0
        %2130 = vmatpush1.msra.mxu0 0.0
        %2131 = vmatprep.subr.mxu0 0.0
        %2132 = vmatpush1.msra.mxu0 0.0
        %2133 = vmatprep.subr.mxu0 0.0
        %2134 = vmatpush1.msra.mxu0 0.0
        %2135 = vmatprep.subr.mxu0 0.0
        %2136 = vmatpush1.msra.mxu0 0.0
        %2137 = vmatprep.subr.mxu0 0.0
        %2138 = vmatpush1.msra.mxu0 0.0
        %2139 = vmatprep.subr.mxu0 0.0
        %2140 = vmatpush1.msra.mxu0 0.0
        %2141 = vmatprep.subr.mxu0 0.0
        %2142 = vmatpush1.msra.mxu0 0.0
        %2143 = vmatprep.subr.mxu0 0.0
        %2144 = vmatpush1.msra.mxu0 0.0
        %2145 = vmatprep.subr.mxu0 0.0
        %2146 = vmatpush1.msra.mxu0 0.0
        %2147 = vmatprep.subr.mxu0 0.0
        %2148 = vmatpush1.msra.mxu0 0.0
        %2149 = vmatprep.subr.mxu0 0.0
        %2150 = vmatpush1.msra.mxu0 0.0
        %2151 = vmatprep.subr.mxu0 0.0
        %2152 = vmatpush1.msra.mxu0 0.0
        %2153 = vmatprep.mubr.f32.mxu0 0.0
        %v2154 = vand.u32 %v1791, 4294901760
        %v2155 = vsub.f32 %v1791, %v2154
        %2156 = vmatmul.mubr.f32.gmra.mrb[0].mxu0 %v2155
        %v2157 = vpop.f32.mrb[0].mxu0
        %v2158 = vadd.f32 %v2046, %v2157
        %v2159 = vpop.f32.mrb[0].mxu0
        %v2160 = vadd.f32 %v2048, %v2159
        %2161 = vmatprep.mubr.f32.mxu0 0.0
        %v2162 = vand.u32 %v1793, 4294901760
        %v2163 = vsub.f32 %v1793, %v2162
        %2164 = vmatmul.mubr.f32.gmra.mrb[0].mxu0 %v2163
        %v2165 = vpop.f32.mrb[0].mxu0
        %v2166 = vadd.f32 %v2053, %v2165
        %v2167 = vpop.f32.mrb[0].mxu0
        %v2168 = vadd.f32 %v2055, %v2167
        %2169 = vdwg.mxu0
        %v2170 = vand.u32 %v1770, 4294901760
        %2171 = vmatprep.subr.mxu0 %v2170
        %v2172 = vand.u32 %v1769, 4294901760
        %2173 = vmatpush1.msra.mxu0 %v2172
        %v2174 = vand.u32 %v1772, 4294901760
        %2175 = vmatprep.subr.mxu0 %v2174
        %v2176 = vand.u32 %v1771, 4294901760
        %2177 = vmatpush1.msra.mxu0 %v2176
        %v2178 = vand.u32 %v1774, 4294901760
        %2179 = vmatprep.subr.mxu0 %v2178
        %v2180 = vand.u32 %v1773, 4294901760
        %2181 = vmatpush1.msra.mxu0 %v2180
        %v2182 = vand.u32 %v1776, 4294901760
        %2183 = vmatprep.subr.mxu0 %v2182
        %v2184 = vand.u32 %v1775, 4294901760
        %2185 = vmatpush1.msra.mxu0 %v2184
        %v2186 = vand.u32 %v1778, 4294901760
        %2187 = vmatprep.subr.mxu0 %v2186
        %v2188 = vand.u32 %v1777, 4294901760
        %2189 = vmatpush1.msra.mxu0 %v2188
        %v2190 = vand.u32 %v1780, 4294901760
        %2191 = vmatprep.subr.mxu0 %v2190
        %v2192 = vand.u32 %v1779, 4294901760
        %2193 = vmatpush1.msra.mxu0 %v2192
        %v2194 = vand.u32 %v1782, 4294901760
        %2195 = vmatprep.subr.mxu0 %v2194
        %v2196 = vand.u32 %v1781, 4294901760
        %2197 = vmatpush1.msra.mxu0 %v2196
        %v2198 = vand.u32 %v1784, 4294901760
        %2199 = vmatprep.subr.mxu0 %v2198
        %v2200 = vand.u32 %v1783, 4294901760
        %2201 = vmatpush1.msra.mxu0 %v2200
        %2202 = vmatprep.subr.mxu0 0.0
        %2203 = vmatpush1.msra.mxu0 0.0
        %2204 = vmatprep.subr.mxu0 0.0
        %2205 = vmatpush1.msra.mxu0 0.0
        %2206 = vmatprep.subr.mxu0 0.0
        %2207 = vmatpush1.msra.mxu0 0.0
        %2208 = vmatprep.subr.mxu0 0.0
        %2209 = vmatpush1.msra.mxu0 0.0
        %2210 = vmatprep.subr.mxu0 0.0
        %2211 = vmatpush1.msra.mxu0 0.0
        %2212 = vmatprep.subr.mxu0 0.0
        %2213 = vmatpush1.msra.mxu0 0.0
        %2214 = vmatprep.subr.mxu0 0.0
        %2215 = vmatpush1.msra.mxu0 0.0
        %2216 = vmatprep.subr.mxu0 0.0
        %2217 = vmatpush1.msra.mxu0 0.0
        %2218 = vmatprep.subr.mxu0 0.0
        %2219 = vmatpush1.msra.mxu0 0.0
        %2220 = vmatprep.subr.mxu0 0.0
        %2221 = vmatpush1.msra.mxu0 0.0
        %2222 = vmatprep.subr.mxu0 0.0
        %2223 = vmatpush1.msra.mxu0 0.0
        %2224 = vmatprep.subr.mxu0 0.0
        %2225 = vmatpush1.msra.mxu0 0.0
        %2226 = vmatprep.subr.mxu0 0.0
        %2227 = vmatpush1.msra.mxu0 0.0
        %2228 = vmatprep.subr.mxu0 0.0
        %2229 = vmatpush1.msra.mxu0 0.0
        %2230 = vmatprep.subr.mxu0 0.0
        %2231 = vmatpush1.msra.mxu0 0.0
        %2232 = vmatprep.subr.mxu0 0.0
        %2233 = vmatpush1.msra.mxu0 0.0
        %2234 = vmatprep.subr.mxu0 0.0
        %2235 = vmatpush1.msra.mxu0 0.0
        %2236 = vmatprep.subr.mxu0 0.0
        %2237 = vmatpush1.msra.mxu0 0.0
        %2238 = vmatprep.subr.mxu0 0.0
        %2239 = vmatpush1.msra.mxu0 0.0
        %2240 = vmatprep.subr.mxu0 0.0
        %2241 = vmatpush1.msra.mxu0 0.0
        %2242 = vmatprep.subr.mxu0 0.0
        %2243 = vmatpush1.msra.mxu0 0.0
        %2244 = vmatprep.subr.mxu0 0.0
        %2245 = vmatpush1.msra.mxu0 0.0
        %2246 = vmatprep.subr.mxu0 0.0
        %2247 = vmatpush1.msra.mxu0 0.0
        %2248 = vmatprep.subr.mxu0 0.0
        %2249 = vmatpush1.msra.mxu0 0.0
        %2250 = vmatprep.mubr.f32.mxu0 0.0
        %v2251 = vand.u32 %v1791, 4294901760
        %v2252 = vsub.f32 %v1791, %v2251
        %v2253 = vand.u32 %v2252, 4294901760
        %2254 = vmatmul.mubr.f32.gmra.mrb[0].mxu0 %v2253
        %v2255 = vpop.f32.mrb[0].mxu0
        %v2256 = vadd.f32 %v2158, %v2255
        %v2257 = vpop.f32.mrb[0].mxu0
        %v2258 = vadd.f32 %v2160, %v2257
        %2259 = vmatprep.mubr.f32.mxu0 0.0
        %v2260 = vand.u32 %v1793, 4294901760
        %v2261 = vsub.f32 %v1793, %v2260
        %v2262 = vand.u32 %v2261, 4294901760
        %2263 = vmatmul.mubr.f32.gmra.mrb[0].mxu0 %v2262
        %v2264 = vpop.f32.mrb[0].mxu0
        %v2265 = vadd.f32 %v2166, %v2264
        %v2266 = vpop.f32.mrb[0].mxu0
        %v2267 = vadd.f32 %v2168, %v2266
        %2268 = vdwg.mxu0
        %v2269 = vand.u32 %v1770, 4294901760
        %v2270 = vsub.f32 %v1770, %v2269
        %v2271 = vand.u32 %v2270, 4294901760
        %2272 = vmatprep.subr.mxu0 %v2271
        %v2273 = vand.u32 %v1769, 4294901760
        %v2274 = vsub.f32 %v1769, %v2273
        %v2275 = vand.u32 %v2274, 4294901760
        %2276 = vmatpush1.msra.mxu0 %v2275
        %v2277 = vand.u32 %v1772, 4294901760
        %v2278 = vsub.f32 %v1772, %v2277
        %v2279 = vand.u32 %v2278, 4294901760
        %2280 = vmatprep.subr.mxu0 %v2279
        %v2281 = vand.u32 %v1771, 4294901760
        %v2282 = vsub.f32 %v1771, %v2281
        %v2283 = vand.u32 %v2282, 4294901760
        %2284 = vmatpush1.msra.mxu0 %v2283
        %v2285 = vand.u32 %v1774, 4294901760
        %v2286 = vsub.f32 %v1774, %v2285
        %v2287 = vand.u32 %v2286, 4294901760
        %2288 = vmatprep.subr.mxu0 %v2287
        %v2289 = vand.u32 %v1773, 4294901760
        %v2290 = vsub.f32 %v1773, %v2289
        %v2291 = vand.u32 %v2290, 4294901760
        %2292 = vmatpush1.msra.mxu0 %v2291
        %v2293 = vand.u32 %v1776, 4294901760
        %v2294 = vsub.f32 %v1776, %v2293
        %v2295 = vand.u32 %v2294, 4294901760
        %2296 = vmatprep.subr.mxu0 %v2295
        %v2297 = vand.u32 %v1775, 4294901760
        %v2298 = vsub.f32 %v1775, %v2297
        %v2299 = vand.u32 %v2298, 4294901760
        %2300 = vmatpush1.msra.mxu0 %v2299
        %v2301 = vand.u32 %v1778, 4294901760
        %v2302 = vsub.f32 %v1778, %v2301
        %v2303 = vand.u32 %v2302, 4294901760
        %2304 = vmatprep.subr.mxu0 %v2303
        %v2305 = vand.u32 %v1777, 4294901760
        %v2306 = vsub.f32 %v1777, %v2305
        %v2307 = vand.u32 %v2306, 4294901760
        %2308 = vmatpush1.msra.mxu0 %v2307
        %v2309 = vand.u32 %v1780, 4294901760
        %v2310 = vsub.f32 %v1780, %v2309
        %v2311 = vand.u32 %v2310, 4294901760
        %2312 = vmatprep.subr.mxu0 %v2311
        %v2313 = vand.u32 %v1779, 4294901760
        %v2314 = vsub.f32 %v1779, %v2313
        %v2315 = vand.u32 %v2314, 4294901760
        %2316 = vmatpush1.msra.mxu0 %v2315
        %v2317 = vand.u32 %v1782, 4294901760
        %v2318 = vsub.f32 %v1782, %v2317
        %v2319 = vand.u32 %v2318, 4294901760
        %2320 = vmatprep.subr.mxu0 %v2319
        %v2321 = vand.u32 %v1781, 4294901760
        %v2322 = vsub.f32 %v1781, %v2321
        %v2323 = vand.u32 %v2322, 4294901760
        %2324 = vmatpush1.msra.mxu0 %v2323
        %v2325 = vand.u32 %v1784, 4294901760
        %v2326 = vsub.f32 %v1784, %v2325
        %v2327 = vand.u32 %v2326, 4294901760
        %2328 = vmatprep.subr.mxu0 %v2327
        %v2329 = vand.u32 %v1783, 4294901760
        %v2330 = vsub.f32 %v1783, %v2329
        %v2331 = vand.u32 %v2330, 4294901760
        %2332 = vmatpush1.msra.mxu0 %v2331
        %2333 = vmatprep.subr.mxu0 0.0
        %2334 = vmatpush1.msra.mxu0 0.0
        %2335 = vmatprep.subr.mxu0 0.0
        %2336 = vmatpush1.msra.mxu0 0.0
        %2337 = vmatprep.subr.mxu0 0.0
        %2338 = vmatpush1.msra.mxu0 0.0
        %2339 = vmatprep.subr.mxu0 0.0
        %2340 = vmatpush1.msra.mxu0 0.0
        %2341 = vmatprep.subr.mxu0 0.0
        %2342 = vmatpush1.msra.mxu0 0.0
        %2343 = vmatprep.subr.mxu0 0.0
        %2344 = vmatpush1.msra.mxu0 0.0
        %2345 = vmatprep.subr.mxu0 0.0
        %2346 = vmatpush1.msra.mxu0 0.0
        %2347 = vmatprep.subr.mxu0 0.0
        %2348 = vmatpush1.msra.mxu0 0.0
        %2349 = vmatprep.subr.mxu0 0.0
        %2350 = vmatpush1.msra.mxu0 0.0
        %2351 = vmatprep.subr.mxu0 0.0
        %2352 = vmatpush1.msra.mxu0 0.0
        %2353 = vmatprep.subr.mxu0 0.0
        %2354 = vmatpush1.msra.mxu0 0.0
        %2355 = vmatprep.subr.mxu0 0.0
        %2356 = vmatpush1.msra.mxu0 0.0
        %2357 = vmatprep.subr.mxu0 0.0
        %2358 = vmatpush1.msra.mxu0 0.0
        %2359 = vmatprep.subr.mxu0 0.0
        %2360 = vmatpush1.msra.mxu0 0.0
        %2361 = vmatprep.subr.mxu0 0.0
        %2362 = vmatpush1.msra.mxu0 0.0
        %2363 = vmatprep.subr.mxu0 0.0
        %2364 = vmatpush1.msra.mxu0 0.0
        %2365 = vmatprep.subr.mxu0 0.0
        %2366 = vmatpush1.msra.mxu0 0.0
        %2367 = vmatprep.subr.mxu0 0.0
        %2368 = vmatpush1.msra.mxu0 0.0
        %2369 = vmatprep.subr.mxu0 0.0
        %2370 = vmatpush1.msra.mxu0 0.0
        %2371 = vmatprep.subr.mxu0 0.0
        %2372 = vmatpush1.msra.mxu0 0.0
        %2373 = vmatprep.subr.mxu0 0.0
        %2374 = vmatpush1.msra.mxu0 0.0
        %2375 = vmatprep.subr.mxu0 0.0
        %2376 = vmatpush1.msra.mxu0 0.0
        %2377 = vmatprep.subr.mxu0 0.0
        %2378 = vmatpush1.msra.mxu0 0.0
        %2379 = vmatprep.subr.mxu0 0.0
        %2380 = vmatpush1.msra.mxu0 0.0
        %2381 = vmatprep.mubr.f32.mxu0 0.0
        %v2382 = vand.u32 %v1791, 4294901760
        %2383 = vmatmul.mubr.f32.gmra.mrb[0].mxu0 %v2382
        %v2384 = vpop.f32.mrb[0].mxu0
        %v2385 = vadd.f32 %v2256, %v2384
        %v2386 = vpop.f32.mrb[0].mxu0
        %v2387 = vadd.f32 %v2258, %v2386
        %2388 = vmatprep.mubr.f32.mxu0 0.0
        %v2389 = vand.u32 %v1793, 4294901760
        %2390 = vmatmul.mubr.f32.gmra.mrb[0].mxu0 %v2389
        %v2391 = vpop.f32.mrb[0].mxu0
        %v2392 = vadd.f32 %v2265, %v2391
        %v2393 = vpop.f32.mrb[0].mxu0
        %v2394 = vadd.f32 %v2267, %v2393
        %2395 = vdwg.mxu0
        %v2396 = vand.u32 %v1770, 4294901760
        %2397 = vmatprep.subr.mxu0 %v2396
        %v2398 = vand.u32 %v1769, 4294901760
        %2399 = vmatpush1.msra.mxu0 %v2398
        %v2400 = vand.u32 %v1772, 4294901760
        %2401 = vmatprep.subr.mxu0 %v2400
        %v2402 = vand.u32 %v1771, 4294901760
        %2403 = vmatpush1.msra.mxu0 %v2402
        %v2404 = vand.u32 %v1774, 4294901760
        %2405 = vmatprep.subr.mxu0 %v2404
        %v2406 = vand.u32 %v1773, 4294901760
        %2407 = vmatpush1.msra.mxu0 %v2406
        %v2408 = vand.u32 %v1776, 4294901760
        %2409 = vmatprep.subr.mxu0 %v2408
        %v2410 = vand.u32 %v1775, 4294901760
        %2411 = vmatpush1.msra.mxu0 %v2410
        %v2412 = vand.u32 %v1778, 4294901760
        %2413 = vmatprep.subr.mxu0 %v2412
        %v2414 = vand.u32 %v1777, 4294901760
        %2415 = vmatpush1.msra.mxu0 %v2414
        %v2416 = vand.u32 %v1780, 4294901760
        %2417 = vmatprep.subr.mxu0 %v2416
        %v2418 = vand.u32 %v1779, 4294901760
        %2419 = vmatpush1.msra.mxu0 %v2418
        %v2420 = vand.u32 %v1782, 4294901760
        %2421 = vmatprep.subr.mxu0 %v2420
        %v2422 = vand.u32 %v1781, 4294901760
        %2423 = vmatpush1.msra.mxu0 %v2422
        %v2424 = vand.u32 %v1784, 4294901760
        %2425 = vmatprep.subr.mxu0 %v2424
        %v2426 = vand.u32 %v1783, 4294901760
        %2427 = vmatpush1.msra.mxu0 %v2426
        %2428 = vmatprep.subr.mxu0 0.0
        %2429 = vmatpush1.msra.mxu0 0.0
        %2430 = vmatprep.subr.mxu0 0.0
        %2431 = vmatpush1.msra.mxu0 0.0
        %2432 = vmatprep.subr.mxu0 0.0
        %2433 = vmatpush1.msra.mxu0 0.0
        %2434 = vmatprep.subr.mxu0 0.0
        %2435 = vmatpush1.msra.mxu0 0.0
        %2436 = vmatprep.subr.mxu0 0.0
        %2437 = vmatpush1.msra.mxu0 0.0
        %2438 = vmatprep.subr.mxu0 0.0
        %2439 = vmatpush1.msra.mxu0 0.0
        %2440 = vmatprep.subr.mxu0 0.0
        %2441 = vmatpush1.msra.mxu0 0.0
        %2442 = vmatprep.subr.mxu0 0.0
        %2443 = vmatpush1.msra.mxu0 0.0
        %2444 = vmatprep.subr.mxu0 0.0
        %2445 = vmatpush1.msra.mxu0 0.0
        %2446 = vmatprep.subr.mxu0 0.0
        %2447 = vmatpush1.msra.mxu0 0.0
        %2448 = vmatprep.subr.mxu0 0.0
        %2449 = vmatpush1.msra.mxu0 0.0
        %2450 = vmatprep.subr.mxu0 0.0
        %2451 = vmatpush1.msra.mxu0 0.0
        %2452 = vmatprep.subr.mxu0 0.0
        %2453 = vmatpush1.msra.mxu0 0.0
        %2454 = vmatprep.subr.mxu0 0.0
        %2455 = vmatpush1.msra.mxu0 0.0
        %2456 = vmatprep.subr.mxu0 0.0
        %2457 = vmatpush1.msra.mxu0 0.0
        %2458 = vmatprep.subr.mxu0 0.0
        %2459 = vmatpush1.msra.mxu0 0.0
        %2460 = vmatprep.subr.mxu0 0.0
        %2461 = vmatpush1.msra.mxu0 0.0
        %2462 = vmatprep.subr.mxu0 0.0
        %2463 = vmatpush1.msra.mxu0 0.0
        %2464 = vmatprep.subr.mxu0 0.0
        %2465 = vmatpush1.msra.mxu0 0.0
        %2466 = vmatprep.subr.mxu0 0.0
        %2467 = vmatpush1.msra.mxu0 0.0
        %2468 = vmatprep.subr.mxu0 0.0
        %2469 = vmatpush1.msra.mxu0 0.0
        %2470 = vmatprep.subr.mxu0 0.0
        %2471 = vmatpush1.msra.mxu0 0.0
        %2472 = vmatprep.subr.mxu0 0.0
        %2473 = vmatpush1.msra.mxu0 0.0
        %2474 = vmatprep.subr.mxu0 0.0
        %2475 = vmatpush1.msra.mxu0 0.0
        %2476 = vmatprep.mubr.f32.mxu0 0.0
        %v2477 = vand.u32 %v1791, 4294901760
        %2478 = vmatmul.mubr.f32.gmra.mrb[0].mxu0 %v2477
        %v2479 = vpop.f32.mrb[0].mxu0
        %v2480 = vadd.f32 %v2385, %v2479
        %v2481 = vpop.f32.mrb[0].mxu0
        %v2482 = vadd.f32 %v2387, %v2481
        %2483 = vmatprep.mubr.f32.mxu0 0.0
        %v2484 = vand.u32 %v1793, 4294901760
        %2485 = vmatmul.mubr.f32.gmra.mrb[0].mxu0 %v2484
        %v2486 = vpop.f32.mrb[0].mxu0
        %v2487 = vadd.f32 %v2392, %v2486
        %v2488 = vpop.f32.mrb[0].mxu0
        %v2489 = vadd.f32 %v2394, %v2488
        %2490 = vdwg.mxu0
        %v2491 = vadd.f32 %v1757, %v2480
        %v2492 = vadd.f32 %v1759, %v2482
        %v2493 = vadd.f32 %v1764, %v2487
        %v2494 = vadd.f32 %v1766, %v2489
        %v2495 = vld [vmem:[%s2] sm:$0x3]
        %v2497 = vlaneseq
        %v2498 = vshrl.u32 %v2497, 7
        %v2499 = vsub.s32 0, %v2498
        %v2500 = vrot.slane %v2495, %v2499
        %v2501 = vlaneseq
        %v2502 = vshrl.u32 %v2501, 7
        %v2503 = vsub.s32 1, %v2502
        %v2504 = vrot.slane %v2495, %v2503
        %v2507 = vadd.f32 %v2491, %v2500
        %v2508 = vadd.f32 %v2492, %v2504
        %v2509 = vadd.f32 %v2493, %v2500
        %v2510 = vadd.f32 %v2494, %v2504
        %vm2511 = vcmp.ge.f32.partialorder %v2507, 0.0
        %vm2512 = vcmp.ge.f32.partialorder %v2508, 0.0
        %vm2513 = vcmp.ge.f32.partialorder %v2509, 0.0
        %vm2514 = vcmp.ge.f32.partialorder %v2510, 0.0
        %v2515 = vld [vmem:[%s3] sm:$0x3]
        %v2517 = vlaneseq
        %v2518 = vshrl.u32 %v2517, 7
        %v2519 = vsub.s32 0, %v2518
        %v2520 = vrot.slane %v2515, %v2519
        %v2521 = vlaneseq
        %v2522 = vshrl.u32 %v2521, 7
        %v2523 = vsub.s32 1, %v2522
        %v2524 = vrot.slane %v2515, %v2523
        %v2527 = vmul.f32 %v2507, %v2520
        %v2528 = vmul.f32 %v2508, %v2524
        %v2529 = vmul.f32 %v2509, %v2520
        %v2530 = vmul.f32 %v2510, %v2524
        %v2531 = vsel %vm2511, %v2507, %v2527
        %v2532 = vsel %vm2512, %v2508, %v2528
        %v2533 = vsel %vm2513, %v2509, %v2529
        %v2534 = vsel %vm2514, %v2510, %v2530
        %2535 = vst.msk [vmem:[%s230] sm:$0xff] %vm367, %v2531
        %2536 = vst.msk [vmem:[%s230 + $0x8] sm:$0xff] %vm367, %v2533
        %2539 = vrot.lane.b32.xlu0 %v2531, 64
        %v2540 = vpop.permute.xlu0 %2539
        %2541 = vrot.lane.b32.xlu0 %v2533, 64
        %v2542 = vpop.permute.xlu0 %2541
        %s2545 = scalar_lea.vmem %s230, 16 [#allocation7]
        %2546 = vst.msk [vmem:[%s2545] sm:$0xff] %vm367, %v2540
        %2547 = vst.msk [vmem:[%s2545 + $0x8] sm:$0xff] %vm367, %v2542
        %s2548 = scalar_lea.vmem %s230, 32 [#allocation7]
        %2549 = vst.msk [vmem:[%s2548] sm:$0xff] %vm367, %v2532
        %2550 = vst.msk [vmem:[%s2548 + $0x8] sm:$0xff] %vm367, %v2534
        %2553 = vrot.lane.b32.xlu0 %v2532, 64
        %v2554 = vpop.permute.xlu0 %2553
        %2555 = vrot.lane.b32.xlu0 %v2534, 64
        %v2556 = vpop.permute.xlu0 %2555
        %s2559 = scalar_lea.vmem %s230, 48 [#allocation7]
        %2560 = vst.msk [vmem:[%s2559] sm:$0xff] %vm367, %v2554
        %2561 = vst.msk [vmem:[%s2559 + $0x8] sm:$0xff] %vm367, %v2556
        %s2562 = sand.u32 %s119, 1
        %s2563 = scalar_lea.sflag [#allocation4], %s2562
        %s2564 = sand.u32 %s119, 1
        %s2565 = smul.addr %s2564, 64
        %s2566 = scalar_lea.vmem [#allocation7], %s2565
        // Predicated region
        $region45: #{tpu_custom_call.1} parent=35 // pred_check
          %p2567 = pneg %p129
        $region46: #{tpu_custom_call.1} parent=35 // pred_check_branch
          %2569 = sbr.rel (%p2567) target = $region48
        $region47: #{tpu_custom_call.1} parent=35 // pred_region
          %s2571 = ssub.s32 1024, 1024
          %2572 = vsyncadd %s2563, %s2571
          %s2573 = smul.addr %s22, 8
          %s2574 = smul.addr %s2573, 128
          %s2575 = scalar_lea.hbm %s4, %s2574
          %s2576 = sshll.u32 %s2566, 4
          %s2577 = int_to_ptr.vmem [resolvable:$true] %s2576
          %2582 = dma.vmem_to_hbm [thread:$0]  %s2577, 1024, %s2575, %s2563, 128, 128, 8
        $region48: #{tpu_custom_call.1} parent=35 // pred_fallthru
          _
      $region36: #{tpu_custom_call.1} parent=5 // pred_fallthru
        _
      %p2583 = scmp.le.s32.totalorder 2, %s17
      // Predicated region
      $region49: #{tpu_custom_call.1} parent=5 // pred_check
        %p2584 = pneg %p2583
      $region50: #{tpu_custom_call.1} parent=5 // pred_check_branch
        %2586 = sbr.rel (%p2584) target = $region52
      $region51: #{tpu_custom_call.1} parent=5 // pred_region
        %s2587 = ssub.s32 %s17, 2
        // Predicated region
        $region53: #{tpu_custom_call.1} parent=51 // pred_check
          %p2588 = pneg %p135
        $region54: #{tpu_custom_call.1} parent=51 // pred_check_branch
          %2590 = sbr.rel (%p2588) target = $region56
        $region55: #{tpu_custom_call.1} parent=51 // pred_region
          %s2591 = sand.u32 %s120, 1
          %s2592 = scalar_lea.sflag [#allocation4], %s2591
          %s2593 = sand.u32 %s120, 1
          %s2594 = smul.addr %s2593, 64
          %s2595 = scalar_lea.vmem [#allocation7], %s2594
          %2596 = dma.done %s2592, 1024
        $region56: #{tpu_custom_call.1} parent=51 // pred_fallthru
          _
      $region52: #{tpu_custom_call.1} parent=5 // pred_fallthru
        _
    $region6: #{tpu_custom_call.1} parent=1 // loop_footer
      %s21 = sadd.s32 1, %s17
    $region7: #{tpu_custom_call.1} parent=1 // loop_footer_branch
      %16 = sbr.rel target = $region3
    $region8: #{tpu_custom_call.1} parent=1 // loop_exit
      _
    %2597 = vsyncpa [#allocation3], 1
    %s2598 = scalar_lea.sflag [#allocation3], 1
    %2599 = vsyncpa %s2598, 1
    %2600 = vsyncpa [#allocation6], 1
    %2601 = vsyncpa [#allocation4], 1
    %s2602 = scalar_lea.sflag [#allocation4], 1
    %2603 = vsyncpa %s2602, 1

</llo_original>
